<compile_context>
chip_gen: v7x
topology: tpu7x:2x2x1
jax: 0.10.0
libtpu: 0.0.40
codegen_flags: <defaults>
</compile_context>

<pallas_src>
import math
from functools import partial

import jax
import jax.numpy as jnp
from jax.experimental import pallas as pl
from jax.experimental.pallas import tpu as pltpu


def _pick_row_tile(h_out, w_out):
    """Smallest output-row tile TH dividing H_out with TH*W_out % 128 == 0
    (lane-dense output stores, <=16-vreg matmul result).  Falls back to the
    whole image (block == full array dim is always legal)."""
    for th in range(1, h_out + 1):
        if h_out % th == 0 and (th * w_out) % 128 == 0:
            return th
    return h_out


def _make_aspp_kernel(TH, W_out, Cin, Cout, K, dilation, tap_group):
    """im2col(dilated taps) -> one deep MXU matmul -> folded-BN + ReLU."""
    TR = TH * W_out
    n_taps = K * K

    def kernel(x_ref, w_ref, sb_ref, o_ref, lhs_ref):
        # x_ref  : (1, H_pad, W_pad, Cin)  bf16  (padded image, resident per batch)
        # w_ref  : (K*K*Cin, Cout)         bf16  (tap-major im2col weights)
        # sb_ref : (2, 1, Cout)            f32   [folded BN scale; shift]
        # o_ref  : (1, Cout, TR)           f32   (channels-major row tile)
        # lhs_ref: (TR, K*K*Cin)           bf16  VMEM scratch (im2col LHS)
        rt = pl.program_id(1)
        row0 = pl.multiple_of(rt * TH, TH)       # first output row of this tile

        # ---- im2col: build the (TR, K*K*Cin) LHS in the VMEM scratch --------
        # Taps are packed so each store covers a 128-lane-aligned column span.
        for t0 in range(0, n_taps, tap_group):
            parts = []
            for t in range(t0, min(t0 + tap_group, n_taps)):
                kh, kw = divmod(t, K)
                patch = x_ref[0,
                              pl.ds(row0 + kh * dilation, TH),   # untiled dim: free
                              pl.ds(kw * dilation, W_out),       # sublane offset
                              :]
                parts.append(patch.reshape(TR, Cin))
            blk = parts[0] if len(parts) == 1 else jnp.concatenate(parts, axis=-1)
            lhs_ref[:, pl.ds(t0 * Cin, blk.shape[-1])] = blk

        # ---- one deep-contraction MXU matmul --------------------------------
        acc = jnp.dot(lhs_ref[...], w_ref[...],
                      preferred_element_type=jnp.float32)        # (TR, Cout) f32

        # ---- fused folded-BN + ReLU epilogue, channels-major store ----------
        y = jnp.maximum(acc * sb_ref[0] + sb_ref[1], 0.0)
        o_ref[0] = y.T                                           # (Cout, TR)

    return kernel


def aspp_forward(x_nchw, conv_w, gamma, beta, run_mean, run_var, *,
                 padding, dilation, eps=1e-5):
    """Pallas equivalent of _ASPPModule.forward (eval mode); NCHW in / NCHW out."""
    B, Cin, H, W = x_nchw.shape
    Cout, Cin_w, K, _ = conv_w.shape
    assert Cin_w == Cin  # TODO(synk): groups != 1 not implemented
    H_pad, W_pad = H + 2 * padding, W + 2 * padding
    H_out = H_pad - dilation * (K - 1)
    W_out = W_pad - dilation * (K - 1)

    # NCHW -> NHWC, zero-pad spatially, cast MXU operand to bf16 on the host.
    x = jnp.transpose(x_nchw, (0, 2, 3, 1))
    x = jnp.pad(x, ((0, 0), (padding, padding), (padding, padding), (0, 0)))
    x = x.astype(jnp.bfloat16)

    # (Cout, Cin, K, K) -> (K*K*Cin, Cout): tap-major im2col weight matrix.
    w = jnp.transpose(conv_w, (2, 3, 1, 0)).reshape(K * K * Cin, Cout)
    w = w.astype(jnp.bfloat16)

    # Fold eval-mode BatchNorm into per-channel scale/shift (f32).
    scale = gamma * jax.lax.rsqrt(run_var + eps)
    shift = beta - run_mean * scale
    sb = jnp.stack([scale, shift]).reshape(2, 1, Cout).astype(jnp.float32)

    # Tap packing so im2col scratch stores start on 128-lane boundaries.
    tap_group = 128 // Cin if (Cin <= 128 and 128 % Cin == 0) else 1

    TH = _pick_row_tile(H_out, W_out)        # output rows per grid step
    TR = TH * W_out                          # flattened rows per grid step
    RT = H_out // TH

    kernel = _make_aspp_kernel(TH, W_out, Cin, Cout, K, dilation, tap_group)

    grid_spec = pltpu.PrefetchScalarGridSpec(
        num_scalar_prefetch=0,
        grid=(B, RT),                        # batch x output-row tiles
        in_specs=[
            # padded image: DMA'd once per batch element, resident across row tiles
            pl.BlockSpec((1, H_pad, W_pad, Cin), lambda b, r: (b, 0, 0, 0)),
            pl.BlockSpec((K * K * Cin, Cout),    lambda b, r: (0, 0)),
            pl.BlockSpec((2, 1, Cout),           lambda b, r: (0, 0, 0)),
        ],
        out_specs=pl.BlockSpec((1, Cout, TR), lambda b, r: (b, 0, r)),
        scratch_shapes=[pltpu.VMEM((TR, K * K * Cin), jnp.bfloat16)],   # im2col LHS
    )

    y = pl.pallas_call(
        kernel,
        out_shape=jax.ShapeDtypeStruct((B, Cout, H_out * W_out), jnp.float32),
        grid_spec=grid_spec,
        compiler_params=pltpu.CompilerParams(
            dimension_semantics=("parallel", "parallel"),
            vmem_limit_bytes=64 * 1024 * 1024),
    )(x, w, sb)

    # (B, Cout, H*W) -> (B, Cout, H, W): pure reshape, no extra HBM transpose pass.
    return y.reshape(B, Cout, H_out, W_out)


# ---------------------------------------------------------------------------
# Pure-JAX reference (mirrors the torch module in eval mode) for verification.
# Operands are rounded to bf16 exactly like the kernel's MXU inputs; compute
# and accumulation stay in f32.
# ---------------------------------------------------------------------------
def _reference(x, w, gamma, beta, mean, var, padding, dilation, eps=1e-5):
    xb = x.astype(jnp.bfloat16).astype(jnp.float32)
    wb = w.astype(jnp.bfloat16).astype(jnp.float32)
    y = jax.lax.conv_general_dilated(
        xb, wb,
        window_strides=(1, 1),
        padding=((padding, padding), (padding, padding)),
        rhs_dilation=(dilation, dilation),
        dimension_numbers=("NCHW", "OIHW", "NCHW"),
        precision=jax.lax.Precision.HIGHEST)
    scale = gamma / jnp.sqrt(var + eps)
    shift = beta - mean * scale
    y = y * scale[None, :, None, None] + shift[None, :, None, None]
    return jnp.maximum(y, 0.0)


if __name__ == "__main__":
    # Small, module-consistent shapes (ASPP branch: 3x3 atrous conv, pad=dil).
    B, Cin, Cout, H, W = 2, 64, 128, 16, 16
    K, dilation = 3, 2
    padding = dilation

    key = jax.random.PRNGKey(0)
    key_x, key_w, key_g, key_b, key_m, key_v = jax.random.split(key, 6)

    x = jax.random.normal(key_x, (B, Cin, H, W), dtype=jnp.float32)
    fan_in = Cin * K * K
    conv_w = jax.random.normal(key_w, (Cout, Cin, K, K), dtype=jnp.float32) \
        * math.sqrt(2.0 / fan_in)                      # kaiming_normal_
    gamma = 1.0 + 0.1 * jax.random.normal(key_g, (Cout,), dtype=jnp.float32)
    beta = 0.1 * jax.random.normal(key_b, (Cout,), dtype=jnp.float32)
    run_mean = 0.1 * jax.random.normal(key_m, (Cout,), dtype=jnp.float32)
    run_var = jnp.abs(1.0 + 0.1 * jax.random.normal(key_v, (Cout,),
                                                    dtype=jnp.float32))

    fwd = jax.jit(partial(aspp_forward, padding=padding, dilation=dilation))
    y = fwd(x, conv_w, gamma, beta, run_mean, run_var)
    y = jax.block_until_ready(y)

    y_ref = _reference(x, conv_w, gamma, beta, run_mean, run_var,
                       padding, dilation)
    assert y.shape == y_ref.shape == (B, Cout, H, W), (y.shape, y_ref.shape)
    max_err = float(jnp.max(jnp.abs(y - y_ref)))
    assert jnp.allclose(y, y_ref, atol=5e-3, rtol=5e-3), max_err

    print("KERNEL_OK")
</pallas_src>

<mosaic_0001>
module attributes {stable_mosaic.version = 11 : i64} {
  func.func @kernel(%arg0: i32, %arg1: i32, %arg2: memref<1x20x20x64xbf16, #tpu.memory_space<vmem>>, %arg3: memref<576x128xbf16, #tpu.memory_space<vmem>>, %arg4: memref<2x1x128xf32, #tpu.memory_space<vmem>>, %arg5: memref<1x128x128xf32, #tpu.memory_space<vmem>>, %arg6: memref<128x576xbf16, #tpu.memory_space<vmem>>) attributes {dimension_semantics = [#tpu.dimension_semantics<parallel>, #tpu.dimension_semantics<parallel>], iteration_bounds = array<i64: 2, 2>, scalar_prefetch = 0 : i64, scratch_operands = 1 : i64, tpu.core_type = #tpu.core_type<tc>, window_params = [{transform_indices = @transform_0, window_bounds = array<i64: 1, 20, 20, 64>}, {pipeline_mode = #tpu.pipeline_mode<synchronous>, transform_indices = @transform_1, window_bounds = array<i64: 576, 128>}, {pipeline_mode = #tpu.pipeline_mode<synchronous>, transform_indices = @transform_2, window_bounds = array<i64: 2, 1, 128>}, {transform_indices = @transform_3, window_bounds = array<i64: 1, 128, 128>}]} {
    %c8_i32 = arith.constant 8 : i32
    %0 = arith.muli %arg1, %c8_i32 : i32
    %1 = tpu.assume_multiple %0, 8 : i32
    %c0_i32 = arith.constant 0 : i32
    %2 = arith.addi %1, %c0_i32 : i32
    %c0 = arith.constant 0 : index
    %3 = arith.index_cast %2 : i32 to index
    %c0_0 = arith.constant 0 : index
    %c0_1 = arith.constant 0 : index
    %4 = vector.load %arg2[%c0, %3, %c0_0, %c0_1] : memref<1x20x20x64xbf16, #tpu.memory_space<vmem>>, vector<1x8x16x64xbf16>
    %5 = vector.shape_cast %4 : vector<1x8x16x64xbf16> to vector<8x16x64xbf16>
    %6 = vector.shape_cast %5 : vector<8x16x64xbf16> to vector<128x64xbf16>
    %c0_i32_2 = arith.constant 0 : i32
    %7 = arith.addi %1, %c0_i32_2 : i32
    %c0_3 = arith.constant 0 : index
    %8 = arith.index_cast %7 : i32 to index
    %c2 = arith.constant 2 : index
    %c0_4 = arith.constant 0 : index
    %9 = vector.load %arg2[%c0_3, %8, %c2, %c0_4] : memref<1x20x20x64xbf16, #tpu.memory_space<vmem>>, vector<1x8x16x64xbf16>
    %10 = vector.shape_cast %9 : vector<1x8x16x64xbf16> to vector<8x16x64xbf16>
    %11 = vector.shape_cast %10 : vector<8x16x64xbf16> to vector<128x64xbf16>
    %12 = tpu.concatenate %6, %11 in 1 : vector<128x64xbf16>, vector<128x64xbf16> -> vector<128x128xbf16>
    %c0_5 = arith.constant 0 : index
    %c0_6 = arith.constant 0 : index
    %13 = vector.load %arg6[%c0_5, %c0_6] : memref<128x576xbf16, #tpu.memory_space<vmem>>, vector<128x128xbf16>
    tpu.vector_store %arg6[%c0_5, %c0_6], %12 {strides = array<i32>} : memref<128x576xbf16, #tpu.memory_space<vmem>>, vector<128x128xbf16>,
    %c0_i32_7 = arith.constant 0 : i32
    %14 = arith.addi %1, %c0_i32_7 : i32
    %c0_8 = arith.constant 0 : index
    %15 = arith.index_cast %14 : i32 to index
    %c4 = arith.constant 4 : index
    %c0_9 = arith.constant 0 : index
    %16 = vector.load %arg2[%c0_8, %15, %c4, %c0_9] : memref<1x20x20x64xbf16, #tpu.memory_space<vmem>>, vector<1x8x16x64xbf16>
    %17 = vector.shape_cast %16 : vector<1x8x16x64xbf16> to vector<8x16x64xbf16>
    %18 = vector.shape_cast %17 : vector<8x16x64xbf16> to vector<128x64xbf16>
    %c2_i32 = arith.constant 2 : i32
    %19 = arith.addi %1, %c2_i32 : i32
    %c0_10 = arith.constant 0 : index
    %20 = arith.index_cast %19 : i32 to index
    %c0_11 = arith.constant 0 : index
    %c0_12 = arith.constant 0 : index
    %21 = vector.load %arg2[%c0_10, %20, %c0_11, %c0_12] : memref<1x20x20x64xbf16, #tpu.memory_space<vmem>>, vector<1x8x16x64xbf16>
    %22 = vector.shape_cast %21 : vector<1x8x16x64xbf16> to vector<8x16x64xbf16>
    %23 = vector.shape_cast %22 : vector<8x16x64xbf16> to vector<128x64xbf16>
    %24 = tpu.concatenate %18, %23 in 1 : vector<128x64xbf16>, vector<128x64xbf16> -> vector<128x128xbf16>
    %c0_13 = arith.constant 0 : index
    %c128 = arith.constant 128 : index
    %25 = vector.load %arg6[%c0_13, %c128] : memref<128x576xbf16, #tpu.memory_space<vmem>>, vector<128x128xbf16>
    tpu.vector_store %arg6[%c0_13, %c128], %24 {strides = array<i32>} : memref<128x576xbf16, #tpu.memory_space<vmem>>, vector<128x128xbf16>,
    %c2_i32_14 = arith.constant 2 : i32
    %26 = arith.addi %1, %c2_i32_14 : i32
    %c0_15 = arith.constant 0 : index
    %27 = arith.index_cast %26 : i32 to index
    %c2_16 = arith.constant 2 : index
    %c0_17 = arith.constant 0 : index
    %28 = vector.load %arg2[%c0_15, %27, %c2_16, %c0_17] : memref<1x20x20x64xbf16, #tpu.memory_space<vmem>>, vector<1x8x16x64xbf16>
    %29 = vector.shape_cast %28 : vector<1x8x16x64xbf16> to vector<8x16x64xbf16>
    %30 = vector.shape_cast %29 : vector<8x16x64xbf16> to vector<128x64xbf16>
    %c2_i32_18 = arith.constant 2 : i32
    %31 = arith.addi %1, %c2_i32_18 : i32
    %c0_19 = arith.constant 0 : index
    %32 = arith.index_cast %31 : i32 to index
    %c4_20 = arith.constant 4 : index
    %c0_21 = arith.constant 0 : index
    %33 = vector.load %arg2[%c0_19, %32, %c4_20, %c0_21] : memref<1x20x20x64xbf16, #tpu.memory_space<vmem>>, vector<1x8x16x64xbf16>
    %34 = vector.shape_cast %33 : vector<1x8x16x64xbf16> to vector<8x16x64xbf16>
    %35 = vector.shape_cast %34 : vector<8x16x64xbf16> to vector<128x64xbf16>
    %36 = tpu.concatenate %30, %35 in 1 : vector<128x64xbf16>, vector<128x64xbf16> -> vector<128x128xbf16>
    %c0_22 = arith.constant 0 : index
    %c256 = arith.constant 256 : index
    %37 = vector.load %arg6[%c0_22, %c256] : memref<128x576xbf16, #tpu.memory_space<vmem>>, vector<128x128xbf16>
    tpu.vector_store %arg6[%c0_22, %c256], %36 {strides = array<i32>} : memref<128x576xbf16, #tpu.memory_space<vmem>>, vector<128x128xbf16>,
    %c4_i32 = arith.constant 4 : i32
    %38 = arith.addi %1, %c4_i32 : i32
    %c0_23 = arith.constant 0 : index
    %39 = arith.index_cast %38 : i32 to index
    %c0_24 = arith.constant 0 : index
    %c0_25 = arith.constant 0 : index
    %40 = vector.load %arg2[%c0_23, %39, %c0_24, %c0_25] : memref<1x20x20x64xbf16, #tpu.memory_space<vmem>>, vector<1x8x16x64xbf16>
    %41 = vector.shape_cast %40 : vector<1x8x16x64xbf16> to vector<8x16x64xbf16>
    %42 = vector.shape_cast %41 : vector<8x16x64xbf16> to vector<128x64xbf16>
    %c4_i32_26 = arith.constant 4 : i32
    %43 = arith.addi %1, %c4_i32_26 : i32
    %c0_27 = arith.constant 0 : index
    %44 = arith.index_cast %43 : i32 to index
    %c2_28 = arith.constant 2 : index
    %c0_29 = arith.constant 0 : index
    %45 = vector.load %arg2[%c0_27, %44, %c2_28, %c0_29] : memref<1x20x20x64xbf16, #tpu.memory_space<vmem>>, vector<1x8x16x64xbf16>
    %46 = vector.shape_cast %45 : vector<1x8x16x64xbf16> to vector<8x16x64xbf16>
    %47 = vector.shape_cast %46 : vector<8x16x64xbf16> to vector<128x64xbf16>
    %48 = tpu.concatenate %42, %47 in 1 : vector<128x64xbf16>, vector<128x64xbf16> -> vector<128x128xbf16>
    %c0_30 = arith.constant 0 : index
    %c384 = arith.constant 384 : index
    %49 = vector.load %arg6[%c0_30, %c384] : memref<128x576xbf16, #tpu.memory_space<vmem>>, vector<128x128xbf16>
    tpu.vector_store %arg6[%c0_30, %c384], %48 {strides = array<i32>} : memref<128x576xbf16, #tpu.memory_space<vmem>>, vector<128x128xbf16>,
    %c4_i32_31 = arith.constant 4 : i32
    %50 = arith.addi %1, %c4_i32_31 : i32
    %c0_32 = arith.constant 0 : index
    %51 = arith.index_cast %50 : i32 to index
    %c4_33 = arith.constant 4 : index
    %c0_34 = arith.constant 0 : index
    %52 = vector.load %arg2[%c0_32, %51, %c4_33, %c0_34] : memref<1x20x20x64xbf16, #tpu.memory_space<vmem>>, vector<1x8x16x64xbf16>
    %53 = vector.shape_cast %52 : vector<1x8x16x64xbf16> to vector<8x16x64xbf16>
    %54 = vector.shape_cast %53 : vector<8x16x64xbf16> to vector<128x64xbf16>
    %c0_35 = arith.constant 0 : index
    %c512 = arith.constant 512 : index
    %55 = vector.load %arg6[%c0_35, %c512] : memref<128x576xbf16, #tpu.memory_space<vmem>>, vector<128x64xbf16>
    tpu.vector_store %arg6[%c0_35, %c512], %54 {strides = array<i32>} : memref<128x576xbf16, #tpu.memory_space<vmem>>, vector<128x64xbf16>,
    %c0_36 = arith.constant 0 : index
    %c0_37 = arith.constant 0 : index
    %56 = vector.load %arg6[%c0_36, %c0_37] : memref<128x576xbf16, #tpu.memory_space<vmem>>, vector<128x576xbf16>
    %c0_38 = arith.constant 0 : index
    %c0_39 = arith.constant 0 : index
    %57 = vector.load %arg3[%c0_38, %c0_39] : memref<576x128xbf16, #tpu.memory_space<vmem>>, vector<576x128xbf16>
    %cst = arith.constant dense<0.000000e+00> : vector<128x128xf32>
    %58 = tpu.matmul %56, %57, %cst {dimension_numbers = #tpu.dot_dimension_numbers<[1], [0], [0], [1], [0, 0, 1, 1], [], []>} : vector<128x576xbf16>, vector<576x128xbf16>, vector<128x128xf32> -> vector<128x128xf32>
    %c0_40 = arith.constant 0 : index
    %c0_41 = arith.constant 0 : index
    %c0_42 = arith.constant 0 : index
    %59 = vector.load %arg4[%c0_40, %c0_41, %c0_42] : memref<2x1x128xf32, #tpu.memory_space<vmem>>, vector<1x1x128xf32>
    %60 = vector.shape_cast %59 : vector<1x1x128xf32> to vector<1x128xf32>
    %61 = vector.broadcast %60 : vector<1x128xf32> to vector<128x128xf32>
    %62 = arith.mulf %58, %61 : vector<128x128xf32>
    %c1 = arith.constant 1 : index
    %c0_43 = arith.constant 0 : index
    %c0_44 = arith.constant 0 : index
    %63 = vector.load %arg4[%c1, %c0_43, %c0_44] : memref<2x1x128xf32, #tpu.memory_space<vmem>>, vector<1x1x128xf32>
    %64 = vector.shape_cast %63 : vector<1x1x128xf32> to vector<1x128xf32>
    %65 = vector.broadcast %64 : vector<1x128xf32> to vector<128x128xf32>
    %66 = arith.addf %62, %65 : vector<128x128xf32>
    %cst_45 = arith.constant 0.000000e+00 : f32
    %67 = vector.broadcast %cst_45 : f32 to vector<128x128xf32>
    %68 = arith.maximumf %66, %67 : vector<128x128xf32>
    %69 = tpu.transpose %68, [1, 0] : vector<128x128xf32> -> vector<128x128xf32>
    %c0_46 = arith.constant 0 : index
    %c0_47 = arith.constant 0 : index
    %c0_48 = arith.constant 0 : index
    %70 = vector.load %arg5[%c0_46, %c0_47, %c0_48] : memref<1x128x128xf32, #tpu.memory_space<vmem>>, vector<1x128x128xf32>
    %71 = vector.shape_cast %70 : vector<1x128x128xf32> to vector<128x128xf32>
    %72 = vector.shape_cast %69 : vector<128x128xf32> to vector<1x128x128xf32>
    tpu.vector_store %arg5[%c0_46, %c0_47, %c0_48], %72 {strides = array<i32>} : memref<1x128x128xf32, #tpu.memory_space<vmem>>, vector<1x128x128xf32>,
    return
  }
  func.func @transform_0(%arg0: i32, %arg1: i32) -> (i32, i32, i32, i32) {
    %c0_i32 = arith.constant 0 : i32
    %c0_i32_0 = arith.constant 0 : i32
    %c0_i32_1 = arith.constant 0 : i32
    %c0_i32_2 = arith.constant 0 : i32
    return %arg0, %c0_i32, %c0_i32_0, %c0_i32_1 : i32, i32, i32, i32
  }
  func.func @transform_1(%arg0: i32, %arg1: i32) -> (i32, i32) {
    %c0_i32 = arith.constant 0 : i32
    %c0_i32_0 = arith.constant 0 : i32
    %c0_i32_1 = arith.constant 0 : i32
    return %c0_i32, %c0_i32_0 : i32, i32
  }
  func.func @transform_2(%arg0: i32, %arg1: i32) -> (i32, i32, i32) {
    %c0_i32 = arith.constant 0 : i32
    %c0_i32_0 = arith.constant 0 : i32
    %c0_i32_1 = arith.constant 0 : i32
    %c0_i32_2 = arith.constant 0 : i32
    return %c0_i32, %c0_i32_0, %c0_i32_1 : i32, i32, i32
  }
  func.func @transform_3(%arg0: i32, %arg1: i32) -> (i32, i32, i32) {
    %c0_i32 = arith.constant 0 : i32
    %c0_i32_0 = arith.constant 0 : i32
    return %arg0, %c0_i32, %arg1 : i32, i32, i32
  }
}

</mosaic_0001>

<llo_original>
// kernel: aspp_forward.1
$region0: #{aspp_forward.1}
  #allocation0 [shape = 'u32[]', space=smem, size = 0x4, offset = 0x4, fixed_abs, tag = 'smem constant byte address 0x4 - core index']
  #allocation1 [shape = 'u32[144,128]{1,0:T(1,128)}', space=vmem, size = 0x12000, scoped, tag = 'internal scratch']
  #allocation2 [shape = 'bf16[128,576]{1,0:T(16,128)(2,1)}', space=vmem, size = 0x28000, scoped, tag = 'scratch operand']
  %s0 = inlined_call_operand.hbm [shape: bf16[2,20,20,64], index: 0, kind: input, shape index: {}]
  %s1 = inlined_call_operand.hbm [shape: bf16[576,128], index: 1, kind: input, shape index: {}]
  %s2 = inlined_call_operand.hbm [shape: f32[2,1,128], index: 2, kind: input, shape index: {}]
  %s3 = inlined_call_operand.hbm [shape: f32[2,128,256], index: 3, kind: output, shape index: {}]
  %s4 = sld [smem:[#allocation0]]
  $region57: #{aspp_forward.1} parent=0
    _
  %s6 = ssub.s32 1, %s4
  %s7 = scalar_select 0, %s6, %s4
  $region1: #{aspp_forward.1} parent=0
    #allocation3 [shape = 'u8[245760]{0}', space=vmem, size = 0x3c000, scoped, tag = 'input window, operand 0']
    #allocation4 [shape = 's32[2]{0}', space=sflag, size = 0x8, scoped, tag = 'scoped memory for aspp_forward.1']
    #allocation5 [shape = 's32[2]{0}', space=sflag, size = 0x8, scoped, tag = 'scoped memory for aspp_forward.1']
    #allocation6 [shape = 'u8[147456]{0}', space=vmem, size = 0x24000, scoped, tag = 'input window, operand 1, single buffered']
    #allocation7 [shape = 's32[1]{0}', space=sflag, size = 0x4, scoped, tag = 'scoped memory for aspp_forward.1']
    #allocation8 [shape = 'u8[1024]{0}', space=vmem, size = 0x400, scoped, tag = 'input window, operand 2, single buffered']
    #allocation9 [shape = 'u8[131072]{0}', space=vmem, size = 0x20000, scoped, tag = 'output window, operand 0']
    %8 = vsyncpa [#allocation4], 0
    %s9 = scalar_lea.sflag [#allocation4], 1
    %10 = vsyncpa %s9, 0
    %11 = vsyncpa [#allocation7], 0
    %12 = vsyncpa [#allocation5], 0
    %s13 = scalar_lea.sflag [#allocation5], 1
    %14 = vsyncpa %s13, 0
    loop: start=0, step=1, limit=6
    $region2: #{aspp_forward.1} parent=1 // loop_pre_header
      _
    $region3: #{aspp_forward.1} parent=1 // loop_header
      %s16 = sphi 0, %s20
      %p17 = scmp.ge.s32.totalorder %s16, 6
      %s23 = sphi 0, %s35
      %s24 = sphi 0, %s31
      %s25 = sphi 0, %s23
      %s26 = sphi 0, %s24
      %s27 = sphi 0, %s25
      %s28 = sphi 0, %s26
      %s38 = sphi 0, %s40
      %s41 = sphi 0, %s38
      %s42 = sphi 0, %s41
      %s58 = sphi 0, %s42
      %s62 = sphi 0, %s62
      %s64 = sphi 0, %s62
      %s65 = sphi 0, %s64
      %s79 = sphi 0, %s65
      %s83 = sphi 0, %s83
      %s85 = sphi 0, %s83
      %s86 = sphi 0, %s85
      %s100 = sphi 0, %s86
      %s108 = sphi 0, %s110
      %s111 = sphi 0, %s108
      %s112 = sphi 0, %s111
      %s128 = sphi 0, %s112
    $region4: #{aspp_forward.1} parent=1 // loop_header_branch
      %19 = sbr.rel (%p17) target = $region8
    $region5: #{aspp_forward.1} parent=1 // loop_body
      %s21 = ssub.s32 %s16, 1
      %s22 = ssub.s32 %s16, 2
      %s29 = sadd.s32 1, %s24
      %p30 = scmp.ge.s32.totalorder %s29, 2
      %s31 = scalar_select %p30, 0, %s29
      %s32 = sadd.s32 1, %s23
      %s33 = scalar_select %p30, %s32, %s23
      %p34 = scmp.ge.s32.totalorder %s33, 2
      %s35 = scalar_select %p34, 0, %s33
      %s36 = ssub.s32 %s23, %s35
      %p37 = scmp.eq.s32.totalorder %s36, 0
      %s39 = sadd.s32 %s38, 1
      %s40 = scalar_select %p37, %s38, %s39
      %p43 = pneg %p37
      %p44 = scmp.eq.s32.totalorder %s16, 3
      %p45 = por %p43, %p44
      %p46 = scmp.ne.s32.totalorder %s38, %s41
      %p47 = scmp.eq.s32.totalorder %s16, 0
      %p48 = por %p46, %p47
      %p49 = scmp.ne.s32.totalorder %s38, %s41
      %p50 = scmp.eq.s32.totalorder %s21, 3
      %p51 = por %p49, %p50
      %p52 = scmp.ne.s32.totalorder %s41, %s42
      %p53 = scmp.eq.s32.totalorder %s21, 0
      %p54 = por %p52, %p53
      %p55 = scmp.ne.s32.totalorder %s41, %s42
      %p56 = scmp.eq.s32.totalorder %s22, 3
      %p57 = por %p55, %p56
      %p59 = scmp.ne.s32.totalorder %s42, %s58
      %p60 = scmp.eq.s32.totalorder %s22, 0
      %p61 = por %p59, %p60
      %s63 = sadd.s32 %s62, 1
      %p66 = scmp.eq.s32.totalorder %s16, 3
      %p67 = scmp.ne.s32.totalorder %s62, %s64
      %p68 = scmp.eq.s32.totalorder %s16, 0
      %p69 = por %p67, %p68
      %p70 = scmp.ne.s32.totalorder %s62, %s64
      %p71 = scmp.eq.s32.totalorder %s21, 3
      %p72 = por %p70, %p71
      %p73 = scmp.ne.s32.totalorder %s64, %s65
      %p74 = scmp.eq.s32.totalorder %s21, 0
      %p75 = por %p73, %p74
      %p76 = scmp.ne.s32.totalorder %s64, %s65
      %p77 = scmp.eq.s32.totalorder %s22, 3
      %p78 = por %p76, %p77
      %p80 = scmp.ne.s32.totalorder %s65, %s79
      %p81 = scmp.eq.s32.totalorder %s22, 0
      %p82 = por %p80, %p81
      %s84 = sadd.s32 %s83, 1
      %p87 = scmp.eq.s32.totalorder %s16, 3
      %p88 = scmp.ne.s32.totalorder %s83, %s85
      %p89 = scmp.eq.s32.totalorder %s16, 0
      %p90 = por %p88, %p89
      %p91 = scmp.ne.s32.totalorder %s83, %s85
      %p92 = scmp.eq.s32.totalorder %s21, 3
      %p93 = por %p91, %p92
      %p94 = scmp.ne.s32.totalorder %s85, %s86
      %p95 = scmp.eq.s32.totalorder %s21, 0
      %p96 = por %p94, %p95
      %p97 = scmp.ne.s32.totalorder %s85, %s86
      %p98 = scmp.eq.s32.totalorder %s22, 3
      %p99 = por %p97, %p98
      %p101 = scmp.ne.s32.totalorder %s86, %s100
      %p102 = scmp.eq.s32.totalorder %s22, 0
      %p103 = por %p101, %p102
      %s104 = ssub.s32 %s23, %s35
      %s105 = ssub.s32 %s24, %s31
      %s106 = sor.u32 %s104, %s105
      %p107 = scmp.eq.s32.totalorder %s106, 0
      %s109 = sadd.s32 %s108, 1
      %s110 = scalar_select %p107, %s108, %s109
      %p113 = pneg %p107
      %p114 = scmp.eq.s32.totalorder %s16, 3
      %p115 = por %p113, %p114
      %p116 = scmp.ne.s32.totalorder %s108, %s111
      %p117 = scmp.eq.s32.totalorder %s16, 0
      %p118 = por %p116, %p117
      %p119 = scmp.ne.s32.totalorder %s108, %s111
      %p120 = scmp.eq.s32.totalorder %s21, 3
      %p121 = por %p119, %p120
      %p122 = scmp.ne.s32.totalorder %s111, %s112
      %p123 = scmp.eq.s32.totalorder %s21, 0
      %p124 = por %p122, %p123
      %p125 = scmp.ne.s32.totalorder %s111, %s112
      %p126 = scmp.eq.s32.totalorder %s22, 3
      %p127 = por %p125, %p126
      %p129 = scmp.ne.s32.totalorder %s112, %s128
      %p130 = scmp.eq.s32.totalorder %s22, 0
      %p131 = por %p129, %p130
      %p132 = scmp.le.s32.totalorder 1, %s16
      %p133 = scmp.lt.s32.totalorder %s16, 5
      %p134 = pnand %p132, %p133
      %p135 = pneg %p134
      // Predicated region
      $region9: #{aspp_forward.1} parent=5 // pred_check
        _
      $region10: #{aspp_forward.1} parent=5 // pred_check_branch
        %137 = sbr.rel (%p134) target = $region12
      $region11: #{aspp_forward.1} parent=5 // pred_region
        %s138 = ssub.s32 %s16, 1
        // Predicated region
        $region13: #{aspp_forward.1} parent=11 // pred_check
          %p139 = pneg %p75
        $region14: #{aspp_forward.1} parent=11 // pred_check_branch
          %141 = sbr.rel (%p139) target = $region16
        $region15: #{aspp_forward.1} parent=11 // pred_region
          %s143 = ssub.s32 4608, 4608
          %144 = vsyncadd [#allocation7], %s143
          %s145 = sshll.u32 [#allocation6], 4
          %s146 = int_to_ptr.vmem [resolvable:$true] %s145
          %151 = dma.hbm_to_vmem [thread:$0]  %s1, 4608, %s146, [#allocation7], 64, 64, 4
        $region16: #{aspp_forward.1} parent=11 // pred_fallthru
          _
        // Predicated region
        $region17: #{aspp_forward.1} parent=11 // pred_check
          %p152 = pneg %p96
        $region18: #{aspp_forward.1} parent=11 // pred_check_branch
          %154 = sbr.rel (%p152) target = $region20
        $region19: #{aspp_forward.1} parent=11 // pred_region
          %s156 = ssub.s32 32, 32
          %157 = vsyncadd [#allocation7], %s156
          %s158 = sshll.u32 [#allocation8], 4
          %s159 = int_to_ptr.vmem [resolvable:$true] %s158
          %164 = dma.hbm_to_vmem [thread:$0]  %s2, 32, %s159, [#allocation7], 16, 16, 1
        $region20: #{aspp_forward.1} parent=11 // pred_fallthru
          _
      $region12: #{aspp_forward.1} parent=5 // pred_fallthru
        _
      %p165 = scmp.lt.s32.totalorder %s16, 4
      // Predicated region
      $region21: #{aspp_forward.1} parent=5 // pred_check
        %p166 = pneg %p165
      $region22: #{aspp_forward.1} parent=5 // pred_check_branch
        %168 = sbr.rel (%p166) target = $region24
      $region23: #{aspp_forward.1} parent=5 // pred_region
        // Predicated region
        $region25: #{aspp_forward.1} parent=23 // pred_check
          %p169 = pneg %p48
        $region26: #{aspp_forward.1} parent=23 // pred_check_branch
          %171 = sbr.rel (%p169) target = $region28
        $region27: #{aspp_forward.1} parent=23 // pred_region
          %s172 = sand.u32 %s38, 1
          %s173 = scalar_lea.sflag [#allocation4], %s172
          %s174 = sand.u32 %s38, 1
          %s175 = smul.addr %s174, 240
          %s176 = scalar_lea.vmem [#allocation3], %s175
          %s178 = ssub.s32 3840, 3840
          %179 = vsyncadd %s173, %s178
          %s180 = smul.addr %s23, 60
          %s181 = smul.addr %s180, 64
          %s182 = scalar_lea.hbm %s0, %s181
          %s183 = sshll.u32 %s176, 4
          %s184 = int_to_ptr.vmem [resolvable:$true] %s183
          %189 = dma.hbm_to_vmem [thread:$0]  %s182, 3840, %s184, %s173, 64, 64, 4
        $region28: #{aspp_forward.1} parent=23 // pred_fallthru
          _
      $region24: #{aspp_forward.1} parent=5 // pred_fallthru
        _
      %p190 = scmp.le.s32.totalorder 1, %s16
      %p191 = scmp.lt.s32.totalorder %s16, 5
      %p192 = pnand %p190, %p191
      %p193 = pneg %p192
      // Predicated region
      $region29: #{aspp_forward.1} parent=5 // pred_check
        _
      $region30: #{aspp_forward.1} parent=5 // pred_check_branch
        %195 = sbr.rel (%p192) target = $region32
      $region31: #{aspp_forward.1} parent=5 // pred_region
        %s196 = ssub.s32 %s16, 1
        %s197 = sand.u32 %s41, 1
        %s198 = scalar_lea.sflag [#allocation4], %s197
        %s199 = sand.u32 %s41, 1
        %s200 = smul.addr %s199, 240
        %s201 = scalar_lea.vmem [#allocation3], %s200
        // Predicated region
        $region33: #{aspp_forward.1} parent=31 // pred_check
          %p202 = pneg %p54
        $region34: #{aspp_forward.1} parent=31 // pred_check_branch
          %204 = sbr.rel (%p202) target = $region36
        $region35: #{aspp_forward.1} parent=31 // pred_region
          %205 = dma.done %s198, 3840
        $region36: #{aspp_forward.1} parent=31 // pred_fallthru
          _
        // Predicated region
        $region37: #{aspp_forward.1} parent=31 // pred_check
          %p206 = pneg %p75
        $region38: #{aspp_forward.1} parent=31 // pred_check_branch
          %208 = sbr.rel (%p206) target = $region40
        $region39: #{aspp_forward.1} parent=31 // pred_region
          %209 = dma.done [#allocation7], 4608
        $region40: #{aspp_forward.1} parent=31 // pred_fallthru
          _
        // Predicated region
        $region41: #{aspp_forward.1} parent=31 // pred_check
          %p210 = pneg %p96
        $region42: #{aspp_forward.1} parent=31 // pred_check_branch
          %212 = sbr.rel (%p210) target = $region44
        $region43: #{aspp_forward.1} parent=31 // pred_region
          %213 = dma.done [#allocation7], 32
        $region44: #{aspp_forward.1} parent=31 // pred_fallthru
          _
        %s214 = sand.u32 %s41, 1
        %s215 = scalar_lea.sflag [#allocation4], %s214
        %s216 = sand.u32 %s41, 1
        %s217 = smul.addr %s216, 240
        %s218 = scalar_lea.vmem [#allocation3], %s217
        %p219 = pneg %p54
        %p220 = pneg %p51
        %p221 = pneg %p75
        %p222 = pneg %p72
        %p223 = pneg %p96
        %p224 = pneg %p93
        %p225 = pneg %p124
        %p226 = pneg %p121
        %s227 = sand.u32 %s111, 1
        %s228 = scalar_lea.sflag [#allocation5], %s227
        %s229 = sand.u32 %s111, 1
        %s230 = smul.addr %s229, 128
        %s231 = scalar_lea.vmem [#allocation9], %s230
        %s233 = smul.u32 %s26, 8
        %s234 = smul.u32 %s233, 3
        %s235 = smul.addr %s234, 4
        %s236 = scalar_lea.vmem %s201, %s235 [#allocation3]
        %v237 = vld [vmem:[%s236] sm:$0xf]
        %v238 = vld [vmem:[%s236 + $0x4] sm:$0xf]
        %v239 = vld [vmem:[%s236 + $0xc] sm:$0xf]
        %v240 = vld [vmem:[%s236 + $0x10] sm:$0xf]
        %v241 = vld [vmem:[%s236 + $0x18] sm:$0xf]
        %v242 = vld [vmem:[%s236 + $0x1c] sm:$0xf]
        %v243 = vld [vmem:[%s236 + $0x24] sm:$0xf]
        %v244 = vld [vmem:[%s236 + $0x28] sm:$0xf]
        %v245 = vld [vmem:[%s236 + $0x30] sm:$0xf]
        %v246 = vld [vmem:[%s236 + $0x34] sm:$0xf]
        %v247 = vld [vmem:[%s236 + $0x3c] sm:$0xf]
        %v248 = vld [vmem:[%s236 + $0x40] sm:$0xf]
        %v249 = vld [vmem:[%s236 + $0x48] sm:$0xf]
        %v250 = vld [vmem:[%s236 + $0x4c] sm:$0xf]
        %v251 = vld [vmem:[%s236 + $0x54] sm:$0xf]
        %v252 = vld [vmem:[%s236 + $0x58] sm:$0xf]
        %v253 = vld [vmem:[%s236] sm:$0xe]
        %v254 = vld [vmem:[%s236 + $0x8] sm:$0x1]
        %v255 = vld [vmem:[%s236 + $0xc] sm:$0xe]
        %v256 = vld [vmem:[%s236 + $0x14] sm:$0x1]
        %v257 = vld [vmem:[%s236 + $0x18] sm:$0xe]
        %v258 = vld [vmem:[%s236 + $0x20] sm:$0x1]
        %v259 = vld [vmem:[%s236 + $0x24] sm:$0xe]
        %v260 = vld [vmem:[%s236 + $0x2c] sm:$0x1]
        %v261 = vld [vmem:[%s236 + $0x30] sm:$0xe]
        %v262 = vld [vmem:[%s236 + $0x38] sm:$0x1]
        %v263 = vld [vmem:[%s236 + $0x3c] sm:$0xe]
        %v264 = vld [vmem:[%s236 + $0x44] sm:$0x1]
        %v265 = vld [vmem:[%s236 + $0x48] sm:$0xe]
        %v266 = vld [vmem:[%s236 + $0x50] sm:$0x1]
        %v267 = vld [vmem:[%s236 + $0x54] sm:$0xe]
        %v268 = vld [vmem:[%s236 + $0x5c] sm:$0x1]
        %vm293 = vcmask 1042432
        %vm294 = vcmask 1046532
        %vm295 = vmor %vm293, %vm294
        %v296 = vrot.slane %v253, 5
        %v297 = vrot.slane %v296, 4
        %v298 = vrot.slane %v238, 5
        %v299 = vsel %vm295, %v297, %v298
        %v300 = vrot.slane %v298, 4
        %v301 = vrot.slane %v254, 5
        %v302 = vsel %vm295, %v300, %v301
        %v303 = vrot.slane %v255, 5
        %v304 = vrot.slane %v303, 4
        %v305 = vrot.slane %v240, 5
        %v306 = vsel %vm295, %v304, %v305
        %v307 = vrot.slane %v305, 4
        %v308 = vrot.slane %v256, 5
        %v309 = vsel %vm295, %v307, %v308
        %v310 = vrot.slane %v257, 5
        %v311 = vrot.slane %v310, 4
        %v312 = vrot.slane %v242, 5
        %v313 = vsel %vm295, %v311, %v312
        %v314 = vrot.slane %v312, 4
        %v315 = vrot.slane %v258, 5
        %v316 = vsel %vm295, %v314, %v315
        %v317 = vrot.slane %v259, 5
        %v318 = vrot.slane %v317, 4
        %v319 = vrot.slane %v244, 5
        %v320 = vsel %vm295, %v318, %v319
        %v321 = vrot.slane %v319, 4
        %v322 = vrot.slane %v260, 5
        %v323 = vsel %vm295, %v321, %v322
        %v324 = vrot.slane %v261, 5
        %v325 = vrot.slane %v324, 4
        %v326 = vrot.slane %v246, 5
        %v327 = vsel %vm295, %v325, %v326
        %v328 = vrot.slane %v326, 4
        %v329 = vrot.slane %v262, 5
        %v330 = vsel %vm295, %v328, %v329
        %v331 = vrot.slane %v263, 5
        %v332 = vrot.slane %v331, 4
        %v333 = vrot.slane %v248, 5
        %v334 = vsel %vm295, %v332, %v333
        %v335 = vrot.slane %v333, 4
        %v336 = vrot.slane %v264, 5
        %v337 = vsel %vm295, %v335, %v336
        %v338 = vrot.slane %v265, 5
        %v339 = vrot.slane %v338, 4
        %v340 = vrot.slane %v250, 5
        %v341 = vsel %vm295, %v339, %v340
        %v342 = vrot.slane %v340, 4
        %v343 = vrot.slane %v266, 5
        %v344 = vsel %vm295, %v342, %v343
        %v345 = vrot.slane %v267, 5
        %v346 = vrot.slane %v345, 4
        %v347 = vrot.slane %v252, 5
        %v348 = vsel %vm295, %v346, %v347
        %v349 = vrot.slane %v347, 4
        %v350 = vrot.slane %v268, 5
        %v351 = vsel %vm295, %v349, %v350
        %v360 = vunpack.c.l.b16 %v237
        %v361 = vunpack.c.l.b16 %v238
        %v362 = vunpack.c.l.b16 %v239
        %v363 = vunpack.c.l.b16 %v240
        %v364 = vunpack.c.l.b16 %v241
        %v365 = vunpack.c.l.b16 %v242
        %v366 = vunpack.c.l.b16 %v243
        %v367 = vunpack.c.l.b16 %v244
        %v368 = vunpack.c.l.b16 %v245
        %v369 = vunpack.c.l.b16 %v246
        %v370 = vunpack.c.l.b16 %v247
        %v371 = vunpack.c.l.b16 %v248
        %v372 = vunpack.c.l.b16 %v249
        %v373 = vunpack.c.l.b16 %v250
        %v374 = vunpack.c.l.b16 %v251
        %v375 = vunpack.c.l.b16 %v252
        %v376 = vpack.c.b16 %v361, %v360
        %v377 = vpack.c.b16 %v363, %v362
        %v378 = vpack.c.b16 %v365, %v364
        %v379 = vpack.c.b16 %v367, %v366
        %v380 = vpack.c.b16 %v369, %v368
        %v381 = vpack.c.b16 %v371, %v370
        %v382 = vpack.c.b16 %v373, %v372
        %v383 = vpack.c.b16 %v375, %v374
        %v384 = vunpack.c.l.b16 %v299
        %v385 = vunpack.c.l.b16 %v302
        %v386 = vunpack.c.l.b16 %v306
        %v387 = vunpack.c.l.b16 %v309
        %v388 = vunpack.c.l.b16 %v313
        %v389 = vunpack.c.l.b16 %v316
        %v390 = vunpack.c.l.b16 %v320
        %v391 = vunpack.c.l.b16 %v323
        %v392 = vunpack.c.l.b16 %v327
        %v393 = vunpack.c.l.b16 %v330
        %v394 = vunpack.c.l.b16 %v334
        %v395 = vunpack.c.l.b16 %v337
        %v396 = vunpack.c.l.b16 %v341
        %v397 = vunpack.c.l.b16 %v344
        %v398 = vunpack.c.l.b16 %v348
        %v399 = vunpack.c.l.b16 %v351
        %v400 = vpack.c.b16 %v385, %v384
        %v401 = vpack.c.b16 %v387, %v386
        %v402 = vpack.c.b16 %v389, %v388
        %v403 = vpack.c.b16 %v391, %v390
        %v404 = vpack.c.b16 %v393, %v392
        %v405 = vpack.c.b16 %v395, %v394
        %v406 = vpack.c.b16 %v397, %v396
        %v407 = vpack.c.b16 %v399, %v398
        %408 = vrot.lane.b32.xlu0 %v400, 64
        %v409 = vpop.permute.xlu0 %408
        %410 = vrot.lane.b32.xlu0 %v401, 64
        %v411 = vpop.permute.xlu0 %410
        %412 = vrot.lane.b32.xlu0 %v402, 64
        %v413 = vpop.permute.xlu0 %412
        %414 = vrot.lane.b32.xlu0 %v403, 64
        %v415 = vpop.permute.xlu0 %414
        %416 = vrot.lane.b32.xlu0 %v404, 64
        %v417 = vpop.permute.xlu0 %416
        %418 = vrot.lane.b32.xlu0 %v405, 64
        %v419 = vpop.permute.xlu0 %418
        %420 = vrot.lane.b32.xlu0 %v406, 64
        %v421 = vpop.permute.xlu0 %420
        %422 = vrot.lane.b32.xlu0 %v407, 64
        %v423 = vpop.permute.xlu0 %422
        %vm424 = vcmask 523264
        %v427 = vsel %vm424, %v376, %v409
        %v431 = vsel %vm424, %v377, %v411
        %v435 = vsel %vm424, %v378, %v413
        %v439 = vsel %vm424, %v379, %v415
        %v443 = vsel %vm424, %v380, %v417
        %v447 = vsel %vm424, %v381, %v419
        %v451 = vsel %vm424, %v382, %v421
        %v455 = vsel %vm424, %v383, %v423
        %457 = vst [vmem:[#allocation2] sm:$0xff] %v427
        %458 = vst [vmem:[#allocation2 + $0x28] sm:$0xff] %v431
        %459 = vst [vmem:[#allocation2 + $0x50] sm:$0xff] %v435
        %460 = vst [vmem:[#allocation2 + $0x78] sm:$0xff] %v439
        %461 = vst [vmem:[#allocation2 + $0xa0] sm:$0xff] %v443
        %462 = vst [vmem:[#allocation2 + $0xc8] sm:$0xff] %v447
        %463 = vst [vmem:[#allocation2 + $0xf0] sm:$0xff] %v451
        %464 = vst [vmem:[#allocation2 + $0x118] sm:$0xff] %v455
        %v465 = vld [vmem:[%s236] sm:$0xc]
        %v466 = vld [vmem:[%s236 + $0x4] sm:$0xf]
        %v467 = vld [vmem:[%s236 + $0x8] sm:$0x3]
        %v468 = vld [vmem:[%s236 + $0xc] sm:$0xc]
        %v469 = vld [vmem:[%s236 + $0x10] sm:$0xf]
        %v470 = vld [vmem:[%s236 + $0x14] sm:$0x3]
        %v471 = vld [vmem:[%s236 + $0x18] sm:$0xc]
        %v472 = vld [vmem:[%s236 + $0x1c] sm:$0xf]
        %v473 = vld [vmem:[%s236 + $0x20] sm:$0x3]
        %v474 = vld [vmem:[%s236 + $0x24] sm:$0xc]
        %v475 = vld [vmem:[%s236 + $0x28] sm:$0xf]
        %v476 = vld [vmem:[%s236 + $0x2c] sm:$0x3]
        %v477 = vld [vmem:[%s236 + $0x30] sm:$0xc]
        %v478 = vld [vmem:[%s236 + $0x34] sm:$0xf]
        %v479 = vld [vmem:[%s236 + $0x38] sm:$0x3]
        %v480 = vld [vmem:[%s236 + $0x3c] sm:$0xc]
        %v481 = vld [vmem:[%s236 + $0x40] sm:$0xf]
        %v482 = vld [vmem:[%s236 + $0x44] sm:$0x3]
        %v483 = vld [vmem:[%s236 + $0x48] sm:$0xc]
        %v484 = vld [vmem:[%s236 + $0x4c] sm:$0xf]
        %v485 = vld [vmem:[%s236 + $0x50] sm:$0x3]
        %v486 = vld [vmem:[%s236 + $0x54] sm:$0xc]
        %v487 = vld [vmem:[%s236 + $0x58] sm:$0xf]
        %v488 = vld [vmem:[%s236 + $0x5c] sm:$0x3]
        %vm513 = vcmask 1041408
        %vm514 = vcmask 1045508
        %vm515 = vmor %vm513, %vm514
        %v516 = vrot.slane %v465, 6
        %v517 = vrot.slane %v516, 4
        %v518 = vrot.slane %v466, 6
        %v519 = vsel %vm515, %v517, %v518
        %v520 = vrot.slane %v518, 4
        %v521 = vrot.slane %v467, 6
        %v522 = vsel %vm515, %v520, %v521
        %v523 = vrot.slane %v468, 6
        %v524 = vrot.slane %v523, 4
        %v525 = vrot.slane %v469, 6
        %v526 = vsel %vm515, %v524, %v525
        %v527 = vrot.slane %v525, 4
        %v528 = vrot.slane %v470, 6
        %v529 = vsel %vm515, %v527, %v528
        %v530 = vrot.slane %v471, 6
        %v531 = vrot.slane %v530, 4
        %v532 = vrot.slane %v472, 6
        %v533 = vsel %vm515, %v531, %v532
        %v534 = vrot.slane %v532, 4
        %v535 = vrot.slane %v473, 6
        %v536 = vsel %vm515, %v534, %v535
        %v537 = vrot.slane %v474, 6
        %v538 = vrot.slane %v537, 4
        %v539 = vrot.slane %v475, 6
        %v540 = vsel %vm515, %v538, %v539
        %v541 = vrot.slane %v539, 4
        %v542 = vrot.slane %v476, 6
        %v543 = vsel %vm515, %v541, %v542
        %v544 = vrot.slane %v477, 6
        %v545 = vrot.slane %v544, 4
        %v546 = vrot.slane %v478, 6
        %v547 = vsel %vm515, %v545, %v546
        %v548 = vrot.slane %v546, 4
        %v549 = vrot.slane %v479, 6
        %v550 = vsel %vm515, %v548, %v549
        %v551 = vrot.slane %v480, 6
        %v552 = vrot.slane %v551, 4
        %v553 = vrot.slane %v481, 6
        %v554 = vsel %vm515, %v552, %v553
        %v555 = vrot.slane %v553, 4
        %v556 = vrot.slane %v482, 6
        %v557 = vsel %vm515, %v555, %v556
        %v558 = vrot.slane %v483, 6
        %v559 = vrot.slane %v558, 4
        %v560 = vrot.slane %v484, 6
        %v561 = vsel %vm515, %v559, %v560
        %v562 = vrot.slane %v560, 4
        %v563 = vrot.slane %v485, 6
        %v564 = vsel %vm515, %v562, %v563
        %v565 = vrot.slane %v486, 6
        %v566 = vrot.slane %v565, 4
        %v567 = vrot.slane %v487, 6
        %v568 = vsel %vm515, %v566, %v567
        %v569 = vrot.slane %v567, 4
        %v570 = vrot.slane %v488, 6
        %v571 = vsel %vm515, %v569, %v570
        %s572 = sadd.s32 %s233, 2
        %s573 = smul.u32 %s572, 3
        %s574 = smul.addr %s573, 4
        %s575 = scalar_lea.vmem %s201, %s574 [#allocation3]
        %v576 = vld [vmem:[%s575] sm:$0xf]
        %v577 = vld [vmem:[%s575 + $0x4] sm:$0xf]
        %v578 = vld [vmem:[%s575 + $0xc] sm:$0xf]
        %v579 = vld [vmem:[%s575 + $0x10] sm:$0xf]
        %v580 = vld [vmem:[%s575 + $0x18] sm:$0xf]
        %v581 = vld [vmem:[%s575 + $0x1c] sm:$0xf]
        %v582 = vld [vmem:[%s575 + $0x24] sm:$0xf]
        %v583 = vld [vmem:[%s575 + $0x28] sm:$0xf]
        %v584 = vld [vmem:[%s575 + $0x30] sm:$0xf]
        %v585 = vld [vmem:[%s575 + $0x34] sm:$0xf]
        %v586 = vld [vmem:[%s575 + $0x3c] sm:$0xf]
        %v587 = vld [vmem:[%s575 + $0x40] sm:$0xf]
        %v588 = vld [vmem:[%s575 + $0x48] sm:$0xf]
        %v589 = vld [vmem:[%s575 + $0x4c] sm:$0xf]
        %v590 = vld [vmem:[%s575 + $0x54] sm:$0xf]
        %v591 = vld [vmem:[%s575 + $0x58] sm:$0xf]
        %v592 = vunpack.c.l.b16 %v519
        %v593 = vunpack.c.l.b16 %v522
        %v594 = vunpack.c.l.b16 %v526
        %v595 = vunpack.c.l.b16 %v529
        %v596 = vunpack.c.l.b16 %v533
        %v597 = vunpack.c.l.b16 %v536
        %v598 = vunpack.c.l.b16 %v540
        %v599 = vunpack.c.l.b16 %v543
        %v600 = vunpack.c.l.b16 %v547
        %v601 = vunpack.c.l.b16 %v550
        %v602 = vunpack.c.l.b16 %v554
        %v603 = vunpack.c.l.b16 %v557
        %v604 = vunpack.c.l.b16 %v561
        %v605 = vunpack.c.l.b16 %v564
        %v606 = vunpack.c.l.b16 %v568
        %v607 = vunpack.c.l.b16 %v571
        %v608 = vpack.c.b16 %v593, %v592
        %v609 = vpack.c.b16 %v595, %v594
        %v610 = vpack.c.b16 %v597, %v596
        %v611 = vpack.c.b16 %v599, %v598
        %v612 = vpack.c.b16 %v601, %v600
        %v613 = vpack.c.b16 %v603, %v602
        %v614 = vpack.c.b16 %v605, %v604
        %v615 = vpack.c.b16 %v607, %v606
        %v632 = vunpack.c.l.b16 %v576
        %v633 = vunpack.c.l.b16 %v577
        %v634 = vunpack.c.l.b16 %v578
        %v635 = vunpack.c.l.b16 %v579
        %v636 = vunpack.c.l.b16 %v580
        %v637 = vunpack.c.l.b16 %v581
        %v638 = vunpack.c.l.b16 %v582
        %v639 = vunpack.c.l.b16 %v583
        %v640 = vunpack.c.l.b16 %v584
        %v641 = vunpack.c.l.b16 %v585
        %v642 = vunpack.c.l.b16 %v586
        %v643 = vunpack.c.l.b16 %v587
        %v644 = vunpack.c.l.b16 %v588
        %v645 = vunpack.c.l.b16 %v589
        %v646 = vunpack.c.l.b16 %v590
        %v647 = vunpack.c.l.b16 %v591
        %v648 = vpack.c.b16 %v633, %v632
        %v649 = vpack.c.b16 %v635, %v634
        %v650 = vpack.c.b16 %v637, %v636
        %v651 = vpack.c.b16 %v639, %v638
        %v652 = vpack.c.b16 %v641, %v640
        %v653 = vpack.c.b16 %v643, %v642
        %v654 = vpack.c.b16 %v645, %v644
        %v655 = vpack.c.b16 %v647, %v646
        %656 = vrot.lane.b32.xlu0 %v648, 64
        %v657 = vpop.permute.xlu0 %656
        %658 = vrot.lane.b32.xlu0 %v649, 64
        %v659 = vpop.permute.xlu0 %658
        %660 = vrot.lane.b32.xlu0 %v650, 64
        %v661 = vpop.permute.xlu0 %660
        %662 = vrot.lane.b32.xlu0 %v651, 64
        %v663 = vpop.permute.xlu0 %662
        %664 = vrot.lane.b32.xlu0 %v652, 64
        %v665 = vpop.permute.xlu0 %664
        %666 = vrot.lane.b32.xlu0 %v653, 64
        %v667 = vpop.permute.xlu0 %666
        %668 = vrot.lane.b32.xlu0 %v654, 64
        %v669 = vpop.permute.xlu0 %668
        %670 = vrot.lane.b32.xlu0 %v655, 64
        %v671 = vpop.permute.xlu0 %670
        %v674 = vsel %vm424, %v608, %v657
        %v678 = vsel %vm424, %v609, %v659
        %v682 = vsel %vm424, %v610, %v661
        %v686 = vsel %vm424, %v611, %v663
        %v690 = vsel %vm424, %v612, %v665
        %v694 = vsel %vm424, %v613, %v667
        %v698 = vsel %vm424, %v614, %v669
        %v702 = vsel %vm424, %v615, %v671
        %704 = vst [vmem:[#allocation2 + $0x8] sm:$0xff] %v674
        %705 = vst [vmem:[#allocation2 + $0x30] sm:$0xff] %v678
        %706 = vst [vmem:[#allocation2 + $0x58] sm:$0xff] %v682
        %707 = vst [vmem:[#allocation2 + $0x80] sm:$0xff] %v686
        %708 = vst [vmem:[#allocation2 + $0xa8] sm:$0xff] %v690
        %709 = vst [vmem:[#allocation2 + $0xd0] sm:$0xff] %v694
        %710 = vst [vmem:[#allocation2 + $0xf8] sm:$0xff] %v698
        %711 = vst [vmem:[#allocation2 + $0x120] sm:$0xff] %v702
        %v712 = vld [vmem:[%s575] sm:$0xe]
        %v713 = vld [vmem:[%s575 + $0x4] sm:$0xf]
        %v714 = vld [vmem:[%s575 + $0x8] sm:$0x1]
        %v715 = vld [vmem:[%s575 + $0xc] sm:$0xe]
        %v716 = vld [vmem:[%s575 + $0x10] sm:$0xf]
        %v717 = vld [vmem:[%s575 + $0x14] sm:$0x1]
        %v718 = vld [vmem:[%s575 + $0x18] sm:$0xe]
        %v719 = vld [vmem:[%s575 + $0x1c] sm:$0xf]
        %v720 = vld [vmem:[%s575 + $0x20] sm:$0x1]
        %v721 = vld [vmem:[%s575 + $0x24] sm:$0xe]
        %v722 = vld [vmem:[%s575 + $0x28] sm:$0xf]
        %v723 = vld [vmem:[%s575 + $0x2c] sm:$0x1]
        %v724 = vld [vmem:[%s575 + $0x30] sm:$0xe]
        %v725 = vld [vmem:[%s575 + $0x34] sm:$0xf]
        %v726 = vld [vmem:[%s575 + $0x38] sm:$0x1]
        %v727 = vld [vmem:[%s575 + $0x3c] sm:$0xe]
        %v728 = vld [vmem:[%s575 + $0x40] sm:$0xf]
        %v729 = vld [vmem:[%s575 + $0x44] sm:$0x1]
        %v730 = vld [vmem:[%s575 + $0x48] sm:$0xe]
        %v731 = vld [vmem:[%s575 + $0x4c] sm:$0xf]
        %v732 = vld [vmem:[%s575 + $0x50] sm:$0x1]
        %v733 = vld [vmem:[%s575 + $0x54] sm:$0xe]
        %v734 = vld [vmem:[%s575 + $0x58] sm:$0xf]
        %v735 = vld [vmem:[%s575 + $0x5c] sm:$0x1]
        %v760 = vrot.slane %v712, 5
        %v761 = vrot.slane %v760, 4
        %v762 = vrot.slane %v713, 5
        %v763 = vsel %vm295, %v761, %v762
        %v764 = vrot.slane %v762, 4
        %v765 = vrot.slane %v714, 5
        %v766 = vsel %vm295, %v764, %v765
        %v767 = vrot.slane %v715, 5
        %v768 = vrot.slane %v767, 4
        %v769 = vrot.slane %v716, 5
        %v770 = vsel %vm295, %v768, %v769
        %v771 = vrot.slane %v769, 4
        %v772 = vrot.slane %v717, 5
        %v773 = vsel %vm295, %v771, %v772
        %v774 = vrot.slane %v718, 5
        %v775 = vrot.slane %v774, 4
        %v776 = vrot.slane %v719, 5
        %v777 = vsel %vm295, %v775, %v776
        %v778 = vrot.slane %v776, 4
        %v779 = vrot.slane %v720, 5
        %v780 = vsel %vm295, %v778, %v779
        %v781 = vrot.slane %v721, 5
        %v782 = vrot.slane %v781, 4
        %v783 = vrot.slane %v722, 5
        %v784 = vsel %vm295, %v782, %v783
        %v785 = vrot.slane %v783, 4
        %v786 = vrot.slane %v723, 5
        %v787 = vsel %vm295, %v785, %v786
        %v788 = vrot.slane %v724, 5
        %v789 = vrot.slane %v788, 4
        %v790 = vrot.slane %v725, 5
        %v791 = vsel %vm295, %v789, %v790
        %v792 = vrot.slane %v790, 4
        %v793 = vrot.slane %v726, 5
        %v794 = vsel %vm295, %v792, %v793
        %v795 = vrot.slane %v727, 5
        %v796 = vrot.slane %v795, 4
        %v797 = vrot.slane %v728, 5
        %v798 = vsel %vm295, %v796, %v797
        %v799 = vrot.slane %v797, 4
        %v800 = vrot.slane %v729, 5
        %v801 = vsel %vm295, %v799, %v800
        %v802 = vrot.slane %v730, 5
        %v803 = vrot.slane %v802, 4
        %v804 = vrot.slane %v731, 5
        %v805 = vsel %vm295, %v803, %v804
        %v806 = vrot.slane %v804, 4
        %v807 = vrot.slane %v732, 5
        %v808 = vsel %vm295, %v806, %v807
        %v809 = vrot.slane %v733, 5
        %v810 = vrot.slane %v809, 4
        %v811 = vrot.slane %v734, 5
        %v812 = vsel %vm295, %v810, %v811
        %v813 = vrot.slane %v811, 4
        %v814 = vrot.slane %v735, 5
        %v815 = vsel %vm295, %v813, %v814
        %v816 = vld [vmem:[%s575] sm:$0xc]
        %v817 = vld [vmem:[%s575 + $0x8] sm:$0x3]
        %v818 = vld [vmem:[%s575 + $0xc] sm:$0xc]
        %v819 = vld [vmem:[%s575 + $0x14] sm:$0x3]
        %v820 = vld [vmem:[%s575 + $0x18] sm:$0xc]
        %v821 = vld [vmem:[%s575 + $0x20] sm:$0x3]
        %v822 = vld [vmem:[%s575 + $0x24] sm:$0xc]
        %v823 = vld [vmem:[%s575 + $0x2c] sm:$0x3]
        %v824 = vld [vmem:[%s575 + $0x30] sm:$0xc]
        %v825 = vld [vmem:[%s575 + $0x38] sm:$0x3]
        %v826 = vld [vmem:[%s575 + $0x3c] sm:$0xc]
        %v827 = vld [vmem:[%s575 + $0x44] sm:$0x3]
        %v828 = vld [vmem:[%s575 + $0x48] sm:$0xc]
        %v829 = vld [vmem:[%s575 + $0x50] sm:$0x3]
        %v830 = vld [vmem:[%s575 + $0x54] sm:$0xc]
        %v831 = vld [vmem:[%s575 + $0x5c] sm:$0x3]
        %v848 = vrot.slane %v816, 6
        %v849 = vrot.slane %v848, 4
        %v850 = vrot.slane %v713, 6
        %v851 = vsel %vm515, %v849, %v850
        %v852 = vrot.slane %v850, 4
        %v853 = vrot.slane %v817, 6
        %v854 = vsel %vm515, %v852, %v853
        %v855 = vrot.slane %v818, 6
        %v856 = vrot.slane %v855, 4
        %v857 = vrot.slane %v716, 6
        %v858 = vsel %vm515, %v856, %v857
        %v859 = vrot.slane %v857, 4
        %v860 = vrot.slane %v819, 6
        %v861 = vsel %vm515, %v859, %v860
        %v862 = vrot.slane %v820, 6
        %v863 = vrot.slane %v862, 4
        %v864 = vrot.slane %v719, 6
        %v865 = vsel %vm515, %v863, %v864
        %v866 = vrot.slane %v864, 4
        %v867 = vrot.slane %v821, 6
        %v868 = vsel %vm515, %v866, %v867
        %v869 = vrot.slane %v822, 6
        %v870 = vrot.slane %v869, 4
        %v871 = vrot.slane %v722, 6
        %v872 = vsel %vm515, %v870, %v871
        %v873 = vrot.slane %v871, 4
        %v874 = vrot.slane %v823, 6
        %v875 = vsel %vm515, %v873, %v874
        %v876 = vrot.slane %v824, 6
        %v877 = vrot.slane %v876, 4
        %v878 = vrot.slane %v725, 6
        %v879 = vsel %vm515, %v877, %v878
        %v880 = vrot.slane %v878, 4
        %v881 = vrot.slane %v825, 6
        %v882 = vsel %vm515, %v880, %v881
        %v883 = vrot.slane %v826, 6
        %v884 = vrot.slane %v883, 4
        %v885 = vrot.slane %v728, 6
        %v886 = vsel %vm515, %v884, %v885
        %v887 = vrot.slane %v885, 4
        %v888 = vrot.slane %v827, 6
        %v889 = vsel %vm515, %v887, %v888
        %v890 = vrot.slane %v828, 6
        %v891 = vrot.slane %v890, 4
        %v892 = vrot.slane %v731, 6
        %v893 = vsel %vm515, %v891, %v892
        %v894 = vrot.slane %v892, 4
        %v895 = vrot.slane %v829, 6
        %v896 = vsel %vm515, %v894, %v895
        %v897 = vrot.slane %v830, 6
        %v898 = vrot.slane %v897, 4
        %v899 = vrot.slane %v734, 6
        %v900 = vsel %vm515, %v898, %v899
        %v901 = vrot.slane %v899, 4
        %v902 = vrot.slane %v831, 6
        %v903 = vsel %vm515, %v901, %v902
        %v904 = vunpack.c.l.b16 %v763
        %v905 = vunpack.c.l.b16 %v766
        %v906 = vunpack.c.l.b16 %v770
        %v907 = vunpack.c.l.b16 %v773
        %v908 = vunpack.c.l.b16 %v777
        %v909 = vunpack.c.l.b16 %v780
        %v910 = vunpack.c.l.b16 %v784
        %v911 = vunpack.c.l.b16 %v787
        %v912 = vunpack.c.l.b16 %v791
        %v913 = vunpack.c.l.b16 %v794
        %v914 = vunpack.c.l.b16 %v798
        %v915 = vunpack.c.l.b16 %v801
        %v916 = vunpack.c.l.b16 %v805
        %v917 = vunpack.c.l.b16 %v808
        %v918 = vunpack.c.l.b16 %v812
        %v919 = vunpack.c.l.b16 %v815
        %v920 = vpack.c.b16 %v905, %v904
        %v921 = vpack.c.b16 %v907, %v906
        %v922 = vpack.c.b16 %v909, %v908
        %v923 = vpack.c.b16 %v911, %v910
        %v924 = vpack.c.b16 %v913, %v912
        %v925 = vpack.c.b16 %v915, %v914
        %v926 = vpack.c.b16 %v917, %v916
        %v927 = vpack.c.b16 %v919, %v918
        %v928 = vunpack.c.l.b16 %v851
        %v929 = vunpack.c.l.b16 %v854
        %v930 = vunpack.c.l.b16 %v858
        %v931 = vunpack.c.l.b16 %v861
        %v932 = vunpack.c.l.b16 %v865
        %v933 = vunpack.c.l.b16 %v868
        %v934 = vunpack.c.l.b16 %v872
        %v935 = vunpack.c.l.b16 %v875
        %v936 = vunpack.c.l.b16 %v879
        %v937 = vunpack.c.l.b16 %v882
        %v938 = vunpack.c.l.b16 %v886
        %v939 = vunpack.c.l.b16 %v889
        %v940 = vunpack.c.l.b16 %v893
        %v941 = vunpack.c.l.b16 %v896
        %v942 = vunpack.c.l.b16 %v900
        %v943 = vunpack.c.l.b16 %v903
        %v944 = vpack.c.b16 %v929, %v928
        %v945 = vpack.c.b16 %v931, %v930
        %v946 = vpack.c.b16 %v933, %v932
        %v947 = vpack.c.b16 %v935, %v934
        %v948 = vpack.c.b16 %v937, %v936
        %v949 = vpack.c.b16 %v939, %v938
        %v950 = vpack.c.b16 %v941, %v940
        %v951 = vpack.c.b16 %v943, %v942
        %952 = vrot.lane.b32.xlu0 %v944, 64
        %v953 = vpop.permute.xlu0 %952
        %954 = vrot.lane.b32.xlu0 %v945, 64
        %v955 = vpop.permute.xlu0 %954
        %956 = vrot.lane.b32.xlu0 %v946, 64
        %v957 = vpop.permute.xlu0 %956
        %958 = vrot.lane.b32.xlu0 %v947, 64
        %v959 = vpop.permute.xlu0 %958
        %960 = vrot.lane.b32.xlu0 %v948, 64
        %v961 = vpop.permute.xlu0 %960
        %962 = vrot.lane.b32.xlu0 %v949, 64
        %v963 = vpop.permute.xlu0 %962
        %964 = vrot.lane.b32.xlu0 %v950, 64
        %v965 = vpop.permute.xlu0 %964
        %966 = vrot.lane.b32.xlu0 %v951, 64
        %v967 = vpop.permute.xlu0 %966
        %v970 = vsel %vm424, %v920, %v953
        %v974 = vsel %vm424, %v921, %v955
        %v978 = vsel %vm424, %v922, %v957
        %v982 = vsel %vm424, %v923, %v959
        %v986 = vsel %vm424, %v924, %v961
        %v990 = vsel %vm424, %v925, %v963
        %v994 = vsel %vm424, %v926, %v965
        %v998 = vsel %vm424, %v927, %v967
        %1000 = vst [vmem:[#allocation2 + $0x10] sm:$0xff] %v970
        %1001 = vst [vmem:[#allocation2 + $0x38] sm:$0xff] %v974
        %1002 = vst [vmem:[#allocation2 + $0x60] sm:$0xff] %v978
        %1003 = vst [vmem:[#allocation2 + $0x88] sm:$0xff] %v982
        %1004 = vst [vmem:[#allocation2 + $0xb0] sm:$0xff] %v986
        %1005 = vst [vmem:[#allocation2 + $0xd8] sm:$0xff] %v990
        %1006 = vst [vmem:[#allocation2 + $0x100] sm:$0xff] %v994
        %1007 = vst [vmem:[#allocation2 + $0x128] sm:$0xff] %v998
        %s1008 = sadd.s32 %s233, 4
        %s1009 = smul.u32 %s1008, 3
        %s1010 = smul.addr %s1009, 4
        %s1011 = scalar_lea.vmem %s201, %s1010 [#allocation3]
        %v1012 = vld [vmem:[%s1011] sm:$0xf]
        %v1013 = vld [vmem:[%s1011 + $0x4] sm:$0xf]
        %v1014 = vld [vmem:[%s1011 + $0xc] sm:$0xf]
        %v1015 = vld [vmem:[%s1011 + $0x10] sm:$0xf]
        %v1016 = vld [vmem:[%s1011 + $0x18] sm:$0xf]
        %v1017 = vld [vmem:[%s1011 + $0x1c] sm:$0xf]
        %v1018 = vld [vmem:[%s1011 + $0x24] sm:$0xf]
        %v1019 = vld [vmem:[%s1011 + $0x28] sm:$0xf]
        %v1020 = vld [vmem:[%s1011 + $0x30] sm:$0xf]
        %v1021 = vld [vmem:[%s1011 + $0x34] sm:$0xf]
        %v1022 = vld [vmem:[%s1011 + $0x3c] sm:$0xf]
        %v1023 = vld [vmem:[%s1011 + $0x40] sm:$0xf]
        %v1024 = vld [vmem:[%s1011 + $0x48] sm:$0xf]
        %v1025 = vld [vmem:[%s1011 + $0x4c] sm:$0xf]
        %v1026 = vld [vmem:[%s1011 + $0x54] sm:$0xf]
        %v1027 = vld [vmem:[%s1011 + $0x58] sm:$0xf]
        %v1028 = vld [vmem:[%s1011] sm:$0xe]
        %v1029 = vld [vmem:[%s1011 + $0x8] sm:$0x1]
        %v1030 = vld [vmem:[%s1011 + $0xc] sm:$0xe]
        %v1031 = vld [vmem:[%s1011 + $0x14] sm:$0x1]
        %v1032 = vld [vmem:[%s1011 + $0x18] sm:$0xe]
        %v1033 = vld [vmem:[%s1011 + $0x20] sm:$0x1]
        %v1034 = vld [vmem:[%s1011 + $0x24] sm:$0xe]
        %v1035 = vld [vmem:[%s1011 + $0x2c] sm:$0x1]
        %v1036 = vld [vmem:[%s1011 + $0x30] sm:$0xe]
        %v1037 = vld [vmem:[%s1011 + $0x38] sm:$0x1]
        %v1038 = vld [vmem:[%s1011 + $0x3c] sm:$0xe]
        %v1039 = vld [vmem:[%s1011 + $0x44] sm:$0x1]
        %v1040 = vld [vmem:[%s1011 + $0x48] sm:$0xe]
        %v1041 = vld [vmem:[%s1011 + $0x50] sm:$0x1]
        %v1042 = vld [vmem:[%s1011 + $0x54] sm:$0xe]
        %v1043 = vld [vmem:[%s1011 + $0x5c] sm:$0x1]
        %v1068 = vrot.slane %v1028, 5
        %v1069 = vrot.slane %v1068, 4
        %v1070 = vrot.slane %v1013, 5
        %v1071 = vsel %vm295, %v1069, %v1070
        %v1072 = vrot.slane %v1070, 4
        %v1073 = vrot.slane %v1029, 5
        %v1074 = vsel %vm295, %v1072, %v1073
        %v1075 = vrot.slane %v1030, 5
        %v1076 = vrot.slane %v1075, 4
        %v1077 = vrot.slane %v1015, 5
        %v1078 = vsel %vm295, %v1076, %v1077
        %v1079 = vrot.slane %v1077, 4
        %v1080 = vrot.slane %v1031, 5
        %v1081 = vsel %vm295, %v1079, %v1080
        %v1082 = vrot.slane %v1032, 5
        %v1083 = vrot.slane %v1082, 4
        %v1084 = vrot.slane %v1017, 5
        %v1085 = vsel %vm295, %v1083, %v1084
        %v1086 = vrot.slane %v1084, 4
        %v1087 = vrot.slane %v1033, 5
        %v1088 = vsel %vm295, %v1086, %v1087
        %v1089 = vrot.slane %v1034, 5
        %v1090 = vrot.slane %v1089, 4
        %v1091 = vrot.slane %v1019, 5
        %v1092 = vsel %vm295, %v1090, %v1091
        %v1093 = vrot.slane %v1091, 4
        %v1094 = vrot.slane %v1035, 5
        %v1095 = vsel %vm295, %v1093, %v1094
        %v1096 = vrot.slane %v1036, 5
        %v1097 = vrot.slane %v1096, 4
        %v1098 = vrot.slane %v1021, 5
        %v1099 = vsel %vm295, %v1097, %v1098
        %v1100 = vrot.slane %v1098, 4
        %v1101 = vrot.slane %v1037, 5
        %v1102 = vsel %vm295, %v1100, %v1101
        %v1103 = vrot.slane %v1038, 5
        %v1104 = vrot.slane %v1103, 4
        %v1105 = vrot.slane %v1023, 5
        %v1106 = vsel %vm295, %v1104, %v1105
        %v1107 = vrot.slane %v1105, 4
        %v1108 = vrot.slane %v1039, 5
        %v1109 = vsel %vm295, %v1107, %v1108
        %v1110 = vrot.slane %v1040, 5
        %v1111 = vrot.slane %v1110, 4
        %v1112 = vrot.slane %v1025, 5
        %v1113 = vsel %vm295, %v1111, %v1112
        %v1114 = vrot.slane %v1112, 4
        %v1115 = vrot.slane %v1041, 5
        %v1116 = vsel %vm295, %v1114, %v1115
        %v1117 = vrot.slane %v1042, 5
        %v1118 = vrot.slane %v1117, 4
        %v1119 = vrot.slane %v1027, 5
        %v1120 = vsel %vm295, %v1118, %v1119
        %v1121 = vrot.slane %v1119, 4
        %v1122 = vrot.slane %v1043, 5
        %v1123 = vsel %vm295, %v1121, %v1122
        %v1132 = vunpack.c.l.b16 %v1012
        %v1133 = vunpack.c.l.b16 %v1013
        %v1134 = vunpack.c.l.b16 %v1014
        %v1135 = vunpack.c.l.b16 %v1015
        %v1136 = vunpack.c.l.b16 %v1016
        %v1137 = vunpack.c.l.b16 %v1017
        %v1138 = vunpack.c.l.b16 %v1018
        %v1139 = vunpack.c.l.b16 %v1019
        %v1140 = vunpack.c.l.b16 %v1020
        %v1141 = vunpack.c.l.b16 %v1021
        %v1142 = vunpack.c.l.b16 %v1022
        %v1143 = vunpack.c.l.b16 %v1023
        %v1144 = vunpack.c.l.b16 %v1024
        %v1145 = vunpack.c.l.b16 %v1025
        %v1146 = vunpack.c.l.b16 %v1026
        %v1147 = vunpack.c.l.b16 %v1027
        %v1148 = vpack.c.b16 %v1133, %v1132
        %v1149 = vpack.c.b16 %v1135, %v1134
        %v1150 = vpack.c.b16 %v1137, %v1136
        %v1151 = vpack.c.b16 %v1139, %v1138
        %v1152 = vpack.c.b16 %v1141, %v1140
        %v1153 = vpack.c.b16 %v1143, %v1142
        %v1154 = vpack.c.b16 %v1145, %v1144
        %v1155 = vpack.c.b16 %v1147, %v1146
        %v1156 = vunpack.c.l.b16 %v1071
        %v1157 = vunpack.c.l.b16 %v1074
        %v1158 = vunpack.c.l.b16 %v1078
        %v1159 = vunpack.c.l.b16 %v1081
        %v1160 = vunpack.c.l.b16 %v1085
        %v1161 = vunpack.c.l.b16 %v1088
        %v1162 = vunpack.c.l.b16 %v1092
        %v1163 = vunpack.c.l.b16 %v1095
        %v1164 = vunpack.c.l.b16 %v1099
        %v1165 = vunpack.c.l.b16 %v1102
        %v1166 = vunpack.c.l.b16 %v1106
        %v1167 = vunpack.c.l.b16 %v1109
        %v1168 = vunpack.c.l.b16 %v1113
        %v1169 = vunpack.c.l.b16 %v1116
        %v1170 = vunpack.c.l.b16 %v1120
        %v1171 = vunpack.c.l.b16 %v1123
        %v1172 = vpack.c.b16 %v1157, %v1156
        %v1173 = vpack.c.b16 %v1159, %v1158
        %v1174 = vpack.c.b16 %v1161, %v1160
        %v1175 = vpack.c.b16 %v1163, %v1162
        %v1176 = vpack.c.b16 %v1165, %v1164
        %v1177 = vpack.c.b16 %v1167, %v1166
        %v1178 = vpack.c.b16 %v1169, %v1168
        %v1179 = vpack.c.b16 %v1171, %v1170
        %1180 = vrot.lane.b32.xlu0 %v1172, 64
        %v1181 = vpop.permute.xlu0 %1180
        %1182 = vrot.lane.b32.xlu0 %v1173, 64
        %v1183 = vpop.permute.xlu0 %1182
        %1184 = vrot.lane.b32.xlu0 %v1174, 64
        %v1185 = vpop.permute.xlu0 %1184
        %1186 = vrot.lane.b32.xlu0 %v1175, 64
        %v1187 = vpop.permute.xlu0 %1186
        %1188 = vrot.lane.b32.xlu0 %v1176, 64
        %v1189 = vpop.permute.xlu0 %1188
        %1190 = vrot.lane.b32.xlu0 %v1177, 64
        %v1191 = vpop.permute.xlu0 %1190
        %1192 = vrot.lane.b32.xlu0 %v1178, 64
        %v1193 = vpop.permute.xlu0 %1192
        %1194 = vrot.lane.b32.xlu0 %v1179, 64
        %v1195 = vpop.permute.xlu0 %1194
        %v1198 = vsel %vm424, %v1148, %v1181
        %v1202 = vsel %vm424, %v1149, %v1183
        %v1206 = vsel %vm424, %v1150, %v1185
        %v1210 = vsel %vm424, %v1151, %v1187
        %v1214 = vsel %vm424, %v1152, %v1189
        %v1218 = vsel %vm424, %v1153, %v1191
        %v1222 = vsel %vm424, %v1154, %v1193
        %v1226 = vsel %vm424, %v1155, %v1195
        %1228 = vst [vmem:[#allocation2 + $0x18] sm:$0xff] %v1198
        %1229 = vst [vmem:[#allocation2 + $0x40] sm:$0xff] %v1202
        %1230 = vst [vmem:[#allocation2 + $0x68] sm:$0xff] %v1206
        %1231 = vst [vmem:[#allocation2 + $0x90] sm:$0xff] %v1210
        %1232 = vst [vmem:[#allocation2 + $0xb8] sm:$0xff] %v1214
        %1233 = vst [vmem:[#allocation2 + $0xe0] sm:$0xff] %v1218
        %1234 = vst [vmem:[#allocation2 + $0x108] sm:$0xff] %v1222
        %1235 = vst [vmem:[#allocation2 + $0x130] sm:$0xff] %v1226
        %v1236 = vld [vmem:[%s1011] sm:$0xc]
        %v1237 = vld [vmem:[%s1011 + $0x4] sm:$0xf]
        %v1238 = vld [vmem:[%s1011 + $0x8] sm:$0x3]
        %v1239 = vld [vmem:[%s1011 + $0xc] sm:$0xc]
        %v1240 = vld [vmem:[%s1011 + $0x10] sm:$0xf]
        %v1241 = vld [vmem:[%s1011 + $0x14] sm:$0x3]
        %v1242 = vld [vmem:[%s1011 + $0x18] sm:$0xc]
        %v1243 = vld [vmem:[%s1011 + $0x1c] sm:$0xf]
        %v1244 = vld [vmem:[%s1011 + $0x20] sm:$0x3]
        %v1245 = vld [vmem:[%s1011 + $0x24] sm:$0xc]
        %v1246 = vld [vmem:[%s1011 + $0x28] sm:$0xf]
        %v1247 = vld [vmem:[%s1011 + $0x2c] sm:$0x3]
        %v1248 = vld [vmem:[%s1011 + $0x30] sm:$0xc]
        %v1249 = vld [vmem:[%s1011 + $0x34] sm:$0xf]
        %v1250 = vld [vmem:[%s1011 + $0x38] sm:$0x3]
        %v1251 = vld [vmem:[%s1011 + $0x3c] sm:$0xc]
        %v1252 = vld [vmem:[%s1011 + $0x40] sm:$0xf]
        %v1253 = vld [vmem:[%s1011 + $0x44] sm:$0x3]
        %v1254 = vld [vmem:[%s1011 + $0x48] sm:$0xc]
        %v1255 = vld [vmem:[%s1011 + $0x4c] sm:$0xf]
        %v1256 = vld [vmem:[%s1011 + $0x50] sm:$0x3]
        %v1257 = vld [vmem:[%s1011 + $0x54] sm:$0xc]
        %v1258 = vld [vmem:[%s1011 + $0x58] sm:$0xf]
        %v1259 = vld [vmem:[%s1011 + $0x5c] sm:$0x3]
        %v1284 = vrot.slane %v1236, 6
        %v1285 = vrot.slane %v1284, 4
        %v1286 = vrot.slane %v1237, 6
        %v1287 = vsel %vm515, %v1285, %v1286
        %v1288 = vrot.slane %v1286, 4
        %v1289 = vrot.slane %v1238, 6
        %v1290 = vsel %vm515, %v1288, %v1289
        %v1291 = vrot.slane %v1239, 6
        %v1292 = vrot.slane %v1291, 4
        %v1293 = vrot.slane %v1240, 6
        %v1294 = vsel %vm515, %v1292, %v1293
        %v1295 = vrot.slane %v1293, 4
        %v1296 = vrot.slane %v1241, 6
        %v1297 = vsel %vm515, %v1295, %v1296
        %v1298 = vrot.slane %v1242, 6
        %v1299 = vrot.slane %v1298, 4
        %v1300 = vrot.slane %v1243, 6
        %v1301 = vsel %vm515, %v1299, %v1300
        %v1302 = vrot.slane %v1300, 4
        %v1303 = vrot.slane %v1244, 6
        %v1304 = vsel %vm515, %v1302, %v1303
        %v1305 = vrot.slane %v1245, 6
        %v1306 = vrot.slane %v1305, 4
        %v1307 = vrot.slane %v1246, 6
        %v1308 = vsel %vm515, %v1306, %v1307
        %v1309 = vrot.slane %v1307, 4
        %v1310 = vrot.slane %v1247, 6
        %v1311 = vsel %vm515, %v1309, %v1310
        %v1312 = vrot.slane %v1248, 6
        %v1313 = vrot.slane %v1312, 4
        %v1314 = vrot.slane %v1249, 6
        %v1315 = vsel %vm515, %v1313, %v1314
        %v1316 = vrot.slane %v1314, 4
        %v1317 = vrot.slane %v1250, 6
        %v1318 = vsel %vm515, %v1316, %v1317
        %v1319 = vrot.slane %v1251, 6
        %v1320 = vrot.slane %v1319, 4
        %v1321 = vrot.slane %v1252, 6
        %v1322 = vsel %vm515, %v1320, %v1321
        %v1323 = vrot.slane %v1321, 4
        %v1324 = vrot.slane %v1253, 6
        %v1325 = vsel %vm515, %v1323, %v1324
        %v1326 = vrot.slane %v1254, 6
        %v1327 = vrot.slane %v1326, 4
        %v1328 = vrot.slane %v1255, 6
        %v1329 = vsel %vm515, %v1327, %v1328
        %v1330 = vrot.slane %v1328, 4
        %v1331 = vrot.slane %v1256, 6
        %v1332 = vsel %vm515, %v1330, %v1331
        %v1333 = vrot.slane %v1257, 6
        %v1334 = vrot.slane %v1333, 4
        %v1335 = vrot.slane %v1258, 6
        %v1336 = vsel %vm515, %v1334, %v1335
        %v1337 = vrot.slane %v1335, 4
        %v1338 = vrot.slane %v1259, 6
        %v1339 = vsel %vm515, %v1337, %v1338
        %v1340 = vunpack.c.l.b16 %v1287
        %v1341 = vunpack.c.l.b16 %v1290
        %v1342 = vunpack.c.l.b16 %v1294
        %v1343 = vunpack.c.l.b16 %v1297
        %v1344 = vunpack.c.l.b16 %v1301
        %v1345 = vunpack.c.l.b16 %v1304
        %v1346 = vunpack.c.l.b16 %v1308
        %v1347 = vunpack.c.l.b16 %v1311
        %v1348 = vunpack.c.l.b16 %v1315
        %v1349 = vunpack.c.l.b16 %v1318
        %v1350 = vunpack.c.l.b16 %v1322
        %v1351 = vunpack.c.l.b16 %v1325
        %v1352 = vunpack.c.l.b16 %v1329
        %v1353 = vunpack.c.l.b16 %v1332
        %v1354 = vunpack.c.l.b16 %v1336
        %v1355 = vunpack.c.l.b16 %v1339
        %v1356 = vpack.c.b16 %v1341, %v1340
        %v1357 = vpack.c.b16 %v1343, %v1342
        %v1358 = vpack.c.b16 %v1345, %v1344
        %v1359 = vpack.c.b16 %v1347, %v1346
        %v1360 = vpack.c.b16 %v1349, %v1348
        %v1361 = vpack.c.b16 %v1351, %v1350
        %v1362 = vpack.c.b16 %v1353, %v1352
        %v1363 = vpack.c.b16 %v1355, %v1354
        %1372 = vst.msk [vmem:[#allocation2 + $0x20] sm:$0xff] %vm424, %v1356
        %1373 = vst.msk [vmem:[#allocation2 + $0x48] sm:$0xff] %vm424, %v1357
        %1374 = vst.msk [vmem:[#allocation2 + $0x70] sm:$0xff] %vm424, %v1358
        %1375 = vst.msk [vmem:[#allocation2 + $0x98] sm:$0xff] %vm424, %v1359
        %1376 = vst.msk [vmem:[#allocation2 + $0xc0] sm:$0xff] %vm424, %v1360
        %1377 = vst.msk [vmem:[#allocation2 + $0xe8] sm:$0xff] %vm424, %v1361
        %1378 = vst.msk [vmem:[#allocation2 + $0x110] sm:$0xff] %vm424, %v1362
        %1379 = vst.msk [vmem:[#allocation2 + $0x138] sm:$0xff] %vm424, %v1363
        %v1380 = vld [vmem:[#allocation2] sm:$0xff]
        %v1381 = vld [vmem:[#allocation2 + $0x8] sm:$0xff]
        %v1382 = vld [vmem:[#allocation2 + $0x10] sm:$0xff]
        %v1383 = vld [vmem:[#allocation2 + $0x18] sm:$0xff]
        %v1384 = vld [vmem:[#allocation2 + $0x20] sm:$0xff]
        %v1385 = vld [vmem:[#allocation2 + $0x28] sm:$0xff]
        %v1386 = vld [vmem:[#allocation2 + $0x30] sm:$0xff]
        %v1387 = vld [vmem:[#allocation2 + $0x38] sm:$0xff]
        %v1388 = vld [vmem:[#allocation2 + $0x40] sm:$0xff]
        %v1389 = vld [vmem:[#allocation2 + $0x48] sm:$0xff]
        %v1390 = vld [vmem:[#allocation2 + $0x50] sm:$0xff]
        %v1391 = vld [vmem:[#allocation2 + $0x58] sm:$0xff]
        %v1392 = vld [vmem:[#allocation2 + $0x60] sm:$0xff]
        %v1393 = vld [vmem:[#allocation2 + $0x68] sm:$0xff]
        %v1394 = vld [vmem:[#allocation2 + $0x70] sm:$0xff]
        %v1395 = vld [vmem:[#allocation2 + $0x78] sm:$0xff]
        %v1396 = vld [vmem:[#allocation2 + $0x80] sm:$0xff]
        %v1397 = vld [vmem:[#allocation2 + $0x88] sm:$0xff]
        %v1398 = vld [vmem:[#allocation2 + $0x90] sm:$0xff]
        %v1399 = vld [vmem:[#allocation2 + $0x98] sm:$0xff]
        %v1400 = vld [vmem:[#allocation2 + $0xa0] sm:$0xff]
        %v1401 = vld [vmem:[#allocation2 + $0xa8] sm:$0xff]
        %v1402 = vld [vmem:[#allocation2 + $0xb0] sm:$0xff]
        %v1403 = vld [vmem:[#allocation2 + $0xb8] sm:$0xff]
        %v1404 = vld [vmem:[#allocation2 + $0xc0] sm:$0xff]
        %v1405 = vld [vmem:[#allocation2 + $0xc8] sm:$0xff]
        %v1406 = vld [vmem:[#allocation2 + $0xd0] sm:$0xff]
        %v1407 = vld [vmem:[#allocation2 + $0xd8] sm:$0xff]
        %v1408 = vld [vmem:[#allocation2 + $0xe0] sm:$0xff]
        %v1409 = vld [vmem:[#allocation2 + $0xe8] sm:$0xff]
        %v1410 = vld [vmem:[#allocation2 + $0xf0] sm:$0xff]
        %v1411 = vld [vmem:[#allocation2 + $0xf8] sm:$0xff]
        %v1412 = vld [vmem:[#allocation2 + $0x100] sm:$0xff]
        %v1413 = vld [vmem:[#allocation2 + $0x108] sm:$0xff]
        %v1414 = vld [vmem:[#allocation2 + $0x110] sm:$0xff]
        %v1415 = vld [vmem:[#allocation2 + $0x118] sm:$0xff]
        %v1416 = vld [vmem:[#allocation2 + $0x120] sm:$0xff]
        %v1417 = vld [vmem:[#allocation2 + $0x128] sm:$0xff]
        %v1418 = vld [vmem:[#allocation2 + $0x130] sm:$0xff]
        %v1419 = vld [vmem:[#allocation2 + $0x138] sm:$0xff]
        %v1420 = vld [vmem:[#allocation6] sm:$0xf]
        %v1421 = vld [vmem:[#allocation6 + $0x4] sm:$0xf]
        %v1422 = vld [vmem:[#allocation6 + $0x8] sm:$0xf]
        %v1423 = vld [vmem:[#allocation6 + $0xc] sm:$0xf]
        %v1424 = vld [vmem:[#allocation6 + $0x10] sm:$0xf]
        %v1425 = vld [vmem:[#allocation6 + $0x14] sm:$0xf]
        %v1426 = vld [vmem:[#allocation6 + $0x18] sm:$0xf]
        %v1427 = vld [vmem:[#allocation6 + $0x1c] sm:$0xf]
        %v1428 = vld [vmem:[#allocation6 + $0x20] sm:$0xf]
        %v1429 = vld [vmem:[#allocation6 + $0x24] sm:$0xf]
        %v1430 = vld [vmem:[#allocation6 + $0x28] sm:$0xf]
        %v1431 = vld [vmem:[#allocation6 + $0x2c] sm:$0xf]
        %v1432 = vld [vmem:[#allocation6 + $0x30] sm:$0xf]
        %v1433 = vld [vmem:[#allocation6 + $0x34] sm:$0xf]
        %v1434 = vld [vmem:[#allocation6 + $0x38] sm:$0xf]
        %v1435 = vld [vmem:[#allocation6 + $0x3c] sm:$0xf]
        %v1436 = vld [vmem:[#allocation6 + $0x40] sm:$0xf]
        %v1437 = vld [vmem:[#allocation6 + $0x44] sm:$0xf]
        %v1438 = vld [vmem:[#allocation6 + $0x48] sm:$0xf]
        %v1439 = vld [vmem:[#allocation6 + $0x4c] sm:$0xf]
        %v1440 = vld [vmem:[#allocation6 + $0x50] sm:$0xf]
        %v1441 = vld [vmem:[#allocation6 + $0x54] sm:$0xf]
        %v1442 = vld [vmem:[#allocation6 + $0x58] sm:$0xf]
        %v1443 = vld [vmem:[#allocation6 + $0x5c] sm:$0xf]
        %v1444 = vld [vmem:[#allocation6 + $0x60] sm:$0xf]
        %v1445 = vld [vmem:[#allocation6 + $0x64] sm:$0xf]
        %v1446 = vld [vmem:[#allocation6 + $0x68] sm:$0xf]
        %v1447 = vld [vmem:[#allocation6 + $0x6c] sm:$0xf]
        %v1448 = vld [vmem:[#allocation6 + $0x70] sm:$0xf]
        %v1449 = vld [vmem:[#allocation6 + $0x74] sm:$0xf]
        %v1450 = vld [vmem:[#allocation6 + $0x78] sm:$0xf]
        %v1451 = vld [vmem:[#allocation6 + $0x7c] sm:$0xf]
        %v1452 = vld [vmem:[#allocation6 + $0x80] sm:$0xf]
        %v1453 = vld [vmem:[#allocation6 + $0x84] sm:$0xf]
        %v1454 = vld [vmem:[#allocation6 + $0x88] sm:$0xf]
        %v1455 = vld [vmem:[#allocation6 + $0x8c] sm:$0xf]
        %v1456 = vld [vmem:[#allocation6 + $0x90] sm:$0xf]
        %v1457 = vld [vmem:[#allocation6 + $0x94] sm:$0xf]
        %v1458 = vld [vmem:[#allocation6 + $0x98] sm:$0xf]
        %v1459 = vld [vmem:[#allocation6 + $0x9c] sm:$0xf]
        %v1460 = vld [vmem:[#allocation6 + $0xa0] sm:$0xf]
        %v1461 = vld [vmem:[#allocation6 + $0xa4] sm:$0xf]
        %v1462 = vld [vmem:[#allocation6 + $0xa8] sm:$0xf]
        %v1463 = vld [vmem:[#allocation6 + $0xac] sm:$0xf]
        %v1464 = vld [vmem:[#allocation6 + $0xb0] sm:$0xf]
        %v1465 = vld [vmem:[#allocation6 + $0xb4] sm:$0xf]
        %v1466 = vld [vmem:[#allocation6 + $0xb8] sm:$0xf]
        %v1467 = vld [vmem:[#allocation6 + $0xbc] sm:$0xf]
        %v1468 = vld [vmem:[#allocation6 + $0xc0] sm:$0xf]
        %v1469 = vld [vmem:[#allocation6 + $0xc4] sm:$0xf]
        %v1470 = vld [vmem:[#allocation6 + $0xc8] sm:$0xf]
        %v1471 = vld [vmem:[#allocation6 + $0xcc] sm:$0xf]
        %v1472 = vld [vmem:[#allocation6 + $0xd0] sm:$0xf]
        %v1473 = vld [vmem:[#allocation6 + $0xd4] sm:$0xf]
        %v1474 = vld [vmem:[#allocation6 + $0xd8] sm:$0xf]
        %v1475 = vld [vmem:[#allocation6 + $0xdc] sm:$0xf]
        %v1476 = vld [vmem:[#allocation6 + $0xe0] sm:$0xf]
        %v1477 = vld [vmem:[#allocation6 + $0xe4] sm:$0xf]
        %v1478 = vld [vmem:[#allocation6 + $0xe8] sm:$0xf]
        %v1479 = vld [vmem:[#allocation6 + $0xec] sm:$0xf]
        %v1480 = vld [vmem:[#allocation6 + $0xf0] sm:$0xf]
        %v1481 = vld [vmem:[#allocation6 + $0xf4] sm:$0xf]
        %v1482 = vld [vmem:[#allocation6 + $0xf8] sm:$0xf]
        %v1483 = vld [vmem:[#allocation6 + $0xfc] sm:$0xf]
        %v1484 = vld [vmem:[#allocation6 + $0x100] sm:$0xf]
        %v1485 = vld [vmem:[#allocation6 + $0x104] sm:$0xf]
        %v1486 = vld [vmem:[#allocation6 + $0x108] sm:$0xf]
        %v1487 = vld [vmem:[#allocation6 + $0x10c] sm:$0xf]
        %v1488 = vld [vmem:[#allocation6 + $0x110] sm:$0xf]
        %v1489 = vld [vmem:[#allocation6 + $0x114] sm:$0xf]
        %v1490 = vld [vmem:[#allocation6 + $0x118] sm:$0xf]
        %v1491 = vld [vmem:[#allocation6 + $0x11c] sm:$0xf]
        %v1564 = vunpack.c.l.b16 %v1420
        %v1565 = vunpack.c.l.b16 %v1421
        %v1566 = vunpack.c.l.b16 %v1422
        %v1567 = vunpack.c.l.b16 %v1423
        %v1568 = vunpack.c.l.b16 %v1424
        %v1569 = vunpack.c.l.b16 %v1425
        %v1570 = vunpack.c.l.b16 %v1426
        %v1571 = vunpack.c.l.b16 %v1427
        %v1572 = vunpack.c.l.b16 %v1428
        %v1573 = vunpack.c.l.b16 %v1429
        %v1574 = vunpack.c.l.b16 %v1430
        %v1575 = vunpack.c.l.b16 %v1431
        %v1576 = vunpack.c.l.b16 %v1432
        %v1577 = vunpack.c.l.b16 %v1433
        %v1578 = vunpack.c.l.b16 %v1434
        %v1579 = vunpack.c.l.b16 %v1435
        %v1580 = vunpack.c.l.b16 %v1436
        %v1581 = vunpack.c.l.b16 %v1437
        %v1582 = vunpack.c.l.b16 %v1438
        %v1583 = vunpack.c.l.b16 %v1439
        %v1584 = vunpack.c.l.b16 %v1440
        %v1585 = vunpack.c.l.b16 %v1441
        %v1586 = vunpack.c.l.b16 %v1442
        %v1587 = vunpack.c.l.b16 %v1443
        %v1588 = vunpack.c.l.b16 %v1444
        %v1589 = vunpack.c.l.b16 %v1445
        %v1590 = vunpack.c.l.b16 %v1446
        %v1591 = vunpack.c.l.b16 %v1447
        %v1592 = vunpack.c.l.b16 %v1448
        %v1593 = vunpack.c.l.b16 %v1449
        %v1594 = vunpack.c.l.b16 %v1450
        %v1595 = vunpack.c.l.b16 %v1451
        %v1596 = vunpack.c.l.b16 %v1452
        %v1597 = vunpack.c.l.b16 %v1453
        %v1598 = vunpack.c.l.b16 %v1454
        %v1599 = vunpack.c.l.b16 %v1455
        %v1600 = vunpack.c.l.b16 %v1456
        %v1601 = vunpack.c.l.b16 %v1457
        %v1602 = vunpack.c.l.b16 %v1458
        %v1603 = vunpack.c.l.b16 %v1459
        %v1604 = vunpack.c.l.b16 %v1460
        %v1605 = vunpack.c.l.b16 %v1461
        %v1606 = vunpack.c.l.b16 %v1462
        %v1607 = vunpack.c.l.b16 %v1463
        %v1608 = vunpack.c.l.b16 %v1464
        %v1609 = vunpack.c.l.b16 %v1465
        %v1610 = vunpack.c.l.b16 %v1466
        %v1611 = vunpack.c.l.b16 %v1467
        %v1612 = vunpack.c.l.b16 %v1468
        %v1613 = vunpack.c.l.b16 %v1469
        %v1614 = vunpack.c.l.b16 %v1470
        %v1615 = vunpack.c.l.b16 %v1471
        %v1616 = vunpack.c.l.b16 %v1472
        %v1617 = vunpack.c.l.b16 %v1473
        %v1618 = vunpack.c.l.b16 %v1474
        %v1619 = vunpack.c.l.b16 %v1475
        %v1620 = vunpack.c.l.b16 %v1476
        %v1621 = vunpack.c.l.b16 %v1477
        %v1622 = vunpack.c.l.b16 %v1478
        %v1623 = vunpack.c.l.b16 %v1479
        %v1624 = vunpack.c.l.b16 %v1480
        %v1625 = vunpack.c.l.b16 %v1481
        %v1626 = vunpack.c.l.b16 %v1482
        %v1627 = vunpack.c.l.b16 %v1483
        %v1628 = vunpack.c.l.b16 %v1484
        %v1629 = vunpack.c.l.b16 %v1485
        %v1630 = vunpack.c.l.b16 %v1486
        %v1631 = vunpack.c.l.b16 %v1487
        %v1632 = vunpack.c.l.b16 %v1488
        %v1633 = vunpack.c.l.b16 %v1489
        %v1634 = vunpack.c.l.b16 %v1490
        %v1635 = vunpack.c.l.b16 %v1491
        %v1636 = vpack.c.b16 %v1565, %v1564
        %v1637 = vpack.c.b16 %v1567, %v1566
        %v1638 = vpack.c.b16 %v1569, %v1568
        %v1639 = vpack.c.b16 %v1571, %v1570
        %v1640 = vpack.c.b16 %v1573, %v1572
        %v1641 = vpack.c.b16 %v1575, %v1574
        %v1642 = vpack.c.b16 %v1577, %v1576
        %v1643 = vpack.c.b16 %v1579, %v1578
        %v1644 = vpack.c.b16 %v1581, %v1580
        %v1645 = vpack.c.b16 %v1583, %v1582
        %v1646 = vpack.c.b16 %v1585, %v1584
        %v1647 = vpack.c.b16 %v1587, %v1586
        %v1648 = vpack.c.b16 %v1589, %v1588
        %v1649 = vpack.c.b16 %v1591, %v1590
        %v1650 = vpack.c.b16 %v1593, %v1592
        %v1651 = vpack.c.b16 %v1595, %v1594
        %v1652 = vpack.c.b16 %v1597, %v1596
        %v1653 = vpack.c.b16 %v1599, %v1598
        %v1654 = vpack.c.b16 %v1601, %v1600
        %v1655 = vpack.c.b16 %v1603, %v1602
        %v1656 = vpack.c.b16 %v1605, %v1604
        %v1657 = vpack.c.b16 %v1607, %v1606
        %v1658 = vpack.c.b16 %v1609, %v1608
        %v1659 = vpack.c.b16 %v1611, %v1610
        %v1660 = vpack.c.b16 %v1613, %v1612
        %v1661 = vpack.c.b16 %v1615, %v1614
        %v1662 = vpack.c.b16 %v1617, %v1616
        %v1663 = vpack.c.b16 %v1619, %v1618
        %v1664 = vpack.c.b16 %v1621, %v1620
        %v1665 = vpack.c.b16 %v1623, %v1622
        %v1666 = vpack.c.b16 %v1625, %v1624
        %v1667 = vpack.c.b16 %v1627, %v1626
        %v1668 = vpack.c.b16 %v1629, %v1628
        %v1669 = vpack.c.b16 %v1631, %v1630
        %v1670 = vpack.c.b16 %v1633, %v1632
        %v1671 = vpack.c.b16 %v1635, %v1634
        %v1709 = vsel %vm424, %v1384, 0
        %v1712 = vsel %vm424, %v1389, 0
        %v1715 = vsel %vm424, %v1394, 0
        %v1718 = vsel %vm424, %v1399, 0
        %v1721 = vsel %vm424, %v1404, 0
        %v1724 = vsel %vm424, %v1409, 0
        %v1727 = vsel %vm424, %v1414, 0
        %v1730 = vsel %vm424, %v1419, 0
        %1732 = vmatprep.subr.bf16.mxu0 0
        %1733 = vmatpush1.bf16.msra.mxu0 %v1636
        %1734 = vmatprep.subr.bf16.mxu0 0
        %1735 = vmatpush1.bf16.msra.mxu0 %v1637
        %1736 = vmatprep.subr.bf16.mxu0 0
        %1737 = vmatpush1.bf16.msra.mxu0 %v1638
        %1738 = vmatprep.subr.bf16.mxu0 0
        %1739 = vmatpush1.bf16.msra.mxu0 %v1639
        %1740 = vmatprep.subr.bf16.mxu0 0
        %1741 = vmatpush1.bf16.msra.mxu0 %v1640
        %1742 = vmatprep.subr.bf16.mxu0 0
        %1743 = vmatpush1.bf16.msra.mxu0 %v1641
        %1744 = vmatprep.subr.bf16.mxu0 0
        %1745 = vmatpush1.bf16.msra.mxu0 %v1642
        %1746 = vmatprep.subr.bf16.mxu0 0
        %1747 = vmatpush1.bf16.msra.mxu0 %v1643
        %1748 = vmatprep.subr.bf16.mxu0 0
        %1749 = vmatpush1.bf16.msra.mxu0 %v1644
        %1750 = vmatprep.subr.bf16.mxu0 0
        %1751 = vmatpush1.bf16.msra.mxu0 %v1645
        %1752 = vmatprep.subr.bf16.mxu0 0
        %1753 = vmatpush1.bf16.msra.mxu0 %v1646
        %1754 = vmatprep.subr.bf16.mxu0 0
        %1755 = vmatpush1.bf16.msra.mxu0 %v1647
        %1756 = vmatprep.subr.bf16.mxu0 0
        %1757 = vmatpush1.bf16.msra.mxu0 %v1648
        %1758 = vmatprep.subr.bf16.mxu0 0
        %1759 = vmatpush1.bf16.msra.mxu0 %v1649
        %1760 = vmatprep.subr.bf16.mxu0 0
        %1761 = vmatpush1.bf16.msra.mxu0 %v1650
        %1762 = vmatprep.subr.bf16.mxu0 0
        %1763 = vmatpush1.bf16.msra.mxu0 %v1651
        %1764 = vmatprep.mubr.bf16.mxu0 %v1381
        %1765 = vmatmul.mubr.bf16.gmra.mrb[0].mxu0 %v1380
        %v1766 = vpop.f32.mrb[0].mxu0
        %v1767 = vadd.f32 0.0, %v1766
        %v1768 = vpop.f32.mrb[0].mxu0
        %v1769 = vpop.f32.mrb[0].mxu0
        %v1770 = vadd.f32 0.0, %v1769
        %v1771 = vpop.f32.mrb[0].mxu0
        %1772 = vmatprep.mubr.bf16.mxu0 %v1386
        %1773 = vmatmul.mubr.bf16.gmra.mrb[0].mxu0 %v1385
        %v1774 = vpop.f32.mrb[0].mxu0
        %v1775 = vadd.f32 0.0, %v1774
        %v1776 = vpop.f32.mrb[0].mxu0
        %v1777 = vpop.f32.mrb[0].mxu0
        %v1778 = vadd.f32 0.0, %v1777
        %v1779 = vpop.f32.mrb[0].mxu0
        %1780 = vmatprep.mubr.bf16.mxu0 %v1391
        %1781 = vmatmul.mubr.bf16.gmra.mrb[0].mxu0 %v1390
        %v1782 = vpop.f32.mrb[0].mxu0
        %v1783 = vadd.f32 0.0, %v1782
        %v1784 = vpop.f32.mrb[0].mxu0
        %v1785 = vpop.f32.mrb[0].mxu0
        %v1786 = vadd.f32 0.0, %v1785
        %v1787 = vpop.f32.mrb[0].mxu0
        %1788 = vmatprep.mubr.bf16.mxu0 %v1396
        %1789 = vmatmul.mubr.bf16.gmra.mrb[0].mxu0 %v1395
        %v1790 = vpop.f32.mrb[0].mxu0
        %v1791 = vadd.f32 0.0, %v1790
        %v1792 = vpop.f32.mrb[0].mxu0
        %v1793 = vpop.f32.mrb[0].mxu0
        %v1794 = vadd.f32 0.0, %v1793
        %v1795 = vpop.f32.mrb[0].mxu0
        %1796 = vmatprep.mubr.bf16.mxu0 %v1401
        %1797 = vmatmul.mubr.bf16.gmra.mrb[0].mxu0 %v1400
        %v1798 = vpop.f32.mrb[0].mxu0
        %v1799 = vadd.f32 0.0, %v1798
        %v1800 = vpop.f32.mrb[0].mxu0
        %v1801 = vpop.f32.mrb[0].mxu0
        %v1802 = vadd.f32 0.0, %v1801
        %v1803 = vpop.f32.mrb[0].mxu0
        %1804 = vmatprep.mubr.bf16.mxu0 %v1406
        %1805 = vmatmul.mubr.bf16.gmra.mrb[0].mxu0 %v1405
        %v1806 = vpop.f32.mrb[0].mxu0
        %v1807 = vadd.f32 0.0, %v1806
        %v1808 = vpop.f32.mrb[0].mxu0
        %v1809 = vpop.f32.mrb[0].mxu0
        %v1810 = vadd.f32 0.0, %v1809
        %v1811 = vpop.f32.mrb[0].mxu0
        %1812 = vmatprep.mubr.bf16.mxu0 %v1411
        %1813 = vmatmul.mubr.bf16.gmra.mrb[0].mxu0 %v1410
        %v1814 = vpop.f32.mrb[0].mxu0
        %v1815 = vadd.f32 0.0, %v1814
        %v1816 = vpop.f32.mrb[0].mxu0
        %v1817 = vpop.f32.mrb[0].mxu0
        %v1818 = vadd.f32 0.0, %v1817
        %v1819 = vpop.f32.mrb[0].mxu0
        %1820 = vmatprep.mubr.bf16.mxu0 %v1416
        %1821 = vmatmul.mubr.bf16.gmra.mrb[0].mxu0 %v1415
        %v1822 = vpop.f32.mrb[0].mxu0
        %v1823 = vadd.f32 0.0, %v1822
        %v1824 = vpop.f32.mrb[0].mxu0
        %v1825 = vpop.f32.mrb[0].mxu0
        %v1826 = vadd.f32 0.0, %v1825
        %v1827 = vpop.f32.mrb[0].mxu0
        %1828 = vdwg.mxu0
        %1829 = vmatprep.subr.bf16.mxu0 0
        %1830 = vmatpush1.bf16.msra.mxu0 %v1652
        %1831 = vmatprep.subr.bf16.mxu0 0
        %1832 = vmatpush1.bf16.msra.mxu0 %v1653
        %1833 = vmatprep.subr.bf16.mxu0 0
        %1834 = vmatpush1.bf16.msra.mxu0 %v1654
        %1835 = vmatprep.subr.bf16.mxu0 0
        %1836 = vmatpush1.bf16.msra.mxu0 %v1655
        %1837 = vmatprep.subr.bf16.mxu0 0
        %1838 = vmatpush1.bf16.msra.mxu0 %v1656
        %1839 = vmatprep.subr.bf16.mxu0 0
        %1840 = vmatpush1.bf16.msra.mxu0 %v1657
        %1841 = vmatprep.subr.bf16.mxu0 0
        %1842 = vmatpush1.bf16.msra.mxu0 %v1658
        %1843 = vmatprep.subr.bf16.mxu0 0
        %1844 = vmatpush1.bf16.msra.mxu0 %v1659
        %1845 = vmatprep.subr.bf16.mxu0 0
        %1846 = vmatpush1.bf16.msra.mxu0 %v1660
        %1847 = vmatprep.subr.bf16.mxu0 0
        %1848 = vmatpush1.bf16.msra.mxu0 %v1661
        %1849 = vmatprep.subr.bf16.mxu0 0
        %1850 = vmatpush1.bf16.msra.mxu0 %v1662
        %1851 = vmatprep.subr.bf16.mxu0 0
        %1852 = vmatpush1.bf16.msra.mxu0 %v1663
        %1853 = vmatprep.subr.bf16.mxu0 0
        %1854 = vmatpush1.bf16.msra.mxu0 %v1664
        %1855 = vmatprep.subr.bf16.mxu0 0
        %1856 = vmatpush1.bf16.msra.mxu0 %v1665
        %1857 = vmatprep.subr.bf16.mxu0 0
        %1858 = vmatpush1.bf16.msra.mxu0 %v1666
        %1859 = vmatprep.subr.bf16.mxu0 0
        %1860 = vmatpush1.bf16.msra.mxu0 %v1667
        %1861 = vmatprep.mubr.bf16.mxu0 %v1383
        %1862 = vmatmul.mubr.bf16.gmra.mrb[0].mxu0 %v1382
        %v1863 = vpop.f32.mrb[0].mxu0
        %v1864 = vadd.f32 %v1767, %v1863
        %v1865 = vpop.f32.mrb[0].mxu0
        %v1866 = vpop.f32.mrb[0].mxu0
        %v1867 = vadd.f32 %v1770, %v1866
        %v1868 = vpop.f32.mrb[0].mxu0
        %1869 = vmatprep.mubr.bf16.mxu0 %v1388
        %1870 = vmatmul.mubr.bf16.gmra.mrb[0].mxu0 %v1387
        %v1871 = vpop.f32.mrb[0].mxu0
        %v1872 = vadd.f32 %v1775, %v1871
        %v1873 = vpop.f32.mrb[0].mxu0
        %v1874 = vpop.f32.mrb[0].mxu0
        %v1875 = vadd.f32 %v1778, %v1874
        %v1876 = vpop.f32.mrb[0].mxu0
        %1877 = vmatprep.mubr.bf16.mxu0 %v1393
        %1878 = vmatmul.mubr.bf16.gmra.mrb[0].mxu0 %v1392
        %v1879 = vpop.f32.mrb[0].mxu0
        %v1880 = vadd.f32 %v1783, %v1879
        %v1881 = vpop.f32.mrb[0].mxu0
        %v1882 = vpop.f32.mrb[0].mxu0
        %v1883 = vadd.f32 %v1786, %v1882
        %v1884 = vpop.f32.mrb[0].mxu0
        %1885 = vmatprep.mubr.bf16.mxu0 %v1398
        %1886 = vmatmul.mubr.bf16.gmra.mrb[0].mxu0 %v1397
        %v1887 = vpop.f32.mrb[0].mxu0
        %v1888 = vadd.f32 %v1791, %v1887
        %v1889 = vpop.f32.mrb[0].mxu0
        %v1890 = vpop.f32.mrb[0].mxu0
        %v1891 = vadd.f32 %v1794, %v1890
        %v1892 = vpop.f32.mrb[0].mxu0
        %1893 = vmatprep.mubr.bf16.mxu0 %v1403
        %1894 = vmatmul.mubr.bf16.gmra.mrb[0].mxu0 %v1402
        %v1895 = vpop.f32.mrb[0].mxu0
        %v1896 = vadd.f32 %v1799, %v1895
        %v1897 = vpop.f32.mrb[0].mxu0
        %v1898 = vpop.f32.mrb[0].mxu0
        %v1899 = vadd.f32 %v1802, %v1898
        %v1900 = vpop.f32.mrb[0].mxu0
        %1901 = vmatprep.mubr.bf16.mxu0 %v1408
        %1902 = vmatmul.mubr.bf16.gmra.mrb[0].mxu0 %v1407
        %v1903 = vpop.f32.mrb[0].mxu0
        %v1904 = vadd.f32 %v1807, %v1903
        %v1905 = vpop.f32.mrb[0].mxu0
        %v1906 = vpop.f32.mrb[0].mxu0
        %v1907 = vadd.f32 %v1810, %v1906
        %v1908 = vpop.f32.mrb[0].mxu0
        %1909 = vmatprep.mubr.bf16.mxu0 %v1413
        %1910 = vmatmul.mubr.bf16.gmra.mrb[0].mxu0 %v1412
        %v1911 = vpop.f32.mrb[0].mxu0
        %v1912 = vadd.f32 %v1815, %v1911
        %v1913 = vpop.f32.mrb[0].mxu0
        %v1914 = vpop.f32.mrb[0].mxu0
        %v1915 = vadd.f32 %v1818, %v1914
        %v1916 = vpop.f32.mrb[0].mxu0
        %1917 = vmatprep.mubr.bf16.mxu0 %v1418
        %1918 = vmatmul.mubr.bf16.gmra.mrb[0].mxu0 %v1417
        %v1919 = vpop.f32.mrb[0].mxu0
        %v1920 = vadd.f32 %v1823, %v1919
        %v1921 = vpop.f32.mrb[0].mxu0
        %v1922 = vpop.f32.mrb[0].mxu0
        %v1923 = vadd.f32 %v1826, %v1922
        %v1924 = vpop.f32.mrb[0].mxu0
        %1925 = vdwg.mxu0
        %1926 = vmatprep.subr.bf16.mxu0 0
        %1927 = vmatpush1.bf16.msra.mxu0 %v1668
        %1928 = vmatprep.subr.bf16.mxu0 0
        %1929 = vmatpush1.bf16.msra.mxu0 %v1669
        %1930 = vmatprep.subr.bf16.mxu0 0
        %1931 = vmatpush1.bf16.msra.mxu0 %v1670
        %1932 = vmatprep.subr.bf16.mxu0 0
        %1933 = vmatpush1.bf16.msra.mxu0 %v1671
        %1934 = vmatprep.subr.bf16.mxu0 0
        %1935 = vmatpush1.bf16.msra.mxu0 0
        %1936 = vmatprep.subr.bf16.mxu0 0
        %1937 = vmatpush1.bf16.msra.mxu0 0
        %1938 = vmatprep.subr.bf16.mxu0 0
        %1939 = vmatpush1.bf16.msra.mxu0 0
        %1940 = vmatprep.subr.bf16.mxu0 0
        %1941 = vmatpush1.bf16.msra.mxu0 0
        %1942 = vmatprep.subr.bf16.mxu0 0
        %1943 = vmatpush1.bf16.msra.mxu0 0
        %1944 = vmatprep.subr.bf16.mxu0 0
        %1945 = vmatpush1.bf16.msra.mxu0 0
        %1946 = vmatprep.subr.bf16.mxu0 0
        %1947 = vmatpush1.bf16.msra.mxu0 0
        %1948 = vmatprep.subr.bf16.mxu0 0
        %1949 = vmatpush1.bf16.msra.mxu0 0
        %1950 = vmatprep.subr.bf16.mxu0 0
        %1951 = vmatpush1.bf16.msra.mxu0 0
        %1952 = vmatprep.subr.bf16.mxu0 0
        %1953 = vmatpush1.bf16.msra.mxu0 0
        %1954 = vmatprep.subr.bf16.mxu0 0
        %1955 = vmatpush1.bf16.msra.mxu0 0
        %1956 = vmatprep.subr.bf16.mxu0 0
        %1957 = vmatpush1.bf16.msra.mxu0 0
        %1958 = vmatprep.mubr.bf16.mxu0 0
        %1959 = vmatmul.mubr.bf16.gmra.mrb[0].mxu0 %v1709
        %v1960 = vpop.f32.mrb[0].mxu0
        %v1961 = vadd.f32 %v1864, %v1960
        %v1962 = vpop.f32.mrb[0].mxu0
        %v1963 = vpop.f32.mrb[0].mxu0
        %v1964 = vadd.f32 %v1867, %v1963
        %v1965 = vpop.f32.mrb[0].mxu0
        %1966 = vmatprep.mubr.bf16.mxu0 0
        %1967 = vmatmul.mubr.bf16.gmra.mrb[0].mxu0 %v1712
        %v1968 = vpop.f32.mrb[0].mxu0
        %v1969 = vadd.f32 %v1872, %v1968
        %v1970 = vpop.f32.mrb[0].mxu0
        %v1971 = vpop.f32.mrb[0].mxu0
        %v1972 = vadd.f32 %v1875, %v1971
        %v1973 = vpop.f32.mrb[0].mxu0
        %1974 = vmatprep.mubr.bf16.mxu0 0
        %1975 = vmatmul.mubr.bf16.gmra.mrb[0].mxu0 %v1715
        %v1976 = vpop.f32.mrb[0].mxu0
        %v1977 = vadd.f32 %v1880, %v1976
        %v1978 = vpop.f32.mrb[0].mxu0
        %v1979 = vpop.f32.mrb[0].mxu0
        %v1980 = vadd.f32 %v1883, %v1979
        %v1981 = vpop.f32.mrb[0].mxu0
        %1982 = vmatprep.mubr.bf16.mxu0 0
        %1983 = vmatmul.mubr.bf16.gmra.mrb[0].mxu0 %v1718
        %v1984 = vpop.f32.mrb[0].mxu0
        %v1985 = vadd.f32 %v1888, %v1984
        %v1986 = vpop.f32.mrb[0].mxu0
        %v1987 = vpop.f32.mrb[0].mxu0
        %v1988 = vadd.f32 %v1891, %v1987
        %v1989 = vpop.f32.mrb[0].mxu0
        %1990 = vmatprep.mubr.bf16.mxu0 0
        %1991 = vmatmul.mubr.bf16.gmra.mrb[0].mxu0 %v1721
        %v1992 = vpop.f32.mrb[0].mxu0
        %v1993 = vadd.f32 %v1896, %v1992
        %v1994 = vpop.f32.mrb[0].mxu0
        %v1995 = vpop.f32.mrb[0].mxu0
        %v1996 = vadd.f32 %v1899, %v1995
        %v1997 = vpop.f32.mrb[0].mxu0
        %1998 = vmatprep.mubr.bf16.mxu0 0
        %1999 = vmatmul.mubr.bf16.gmra.mrb[0].mxu0 %v1724
        %v2000 = vpop.f32.mrb[0].mxu0
        %v2001 = vadd.f32 %v1904, %v2000
        %v2002 = vpop.f32.mrb[0].mxu0
        %v2003 = vpop.f32.mrb[0].mxu0
        %v2004 = vadd.f32 %v1907, %v2003
        %v2005 = vpop.f32.mrb[0].mxu0
        %2006 = vmatprep.mubr.bf16.mxu0 0
        %2007 = vmatmul.mubr.bf16.gmra.mrb[0].mxu0 %v1727
        %v2008 = vpop.f32.mrb[0].mxu0
        %v2009 = vadd.f32 %v1912, %v2008
        %v2010 = vpop.f32.mrb[0].mxu0
        %v2011 = vpop.f32.mrb[0].mxu0
        %v2012 = vadd.f32 %v1915, %v2011
        %v2013 = vpop.f32.mrb[0].mxu0
        %2014 = vmatprep.mubr.bf16.mxu0 0
        %2015 = vmatmul.mubr.bf16.gmra.mrb[0].mxu0 %v1730
        %v2016 = vpop.f32.mrb[0].mxu0
        %v2017 = vadd.f32 %v1920, %v2016
        %v2018 = vpop.f32.mrb[0].mxu0
        %v2019 = vpop.f32.mrb[0].mxu0
        %v2020 = vadd.f32 %v1923, %v2019
        %v2021 = vpop.f32.mrb[0].mxu0
        %2022 = vdwg.mxu0
        %v2023 = vld [vmem:[#allocation8] sm:$0x1]
        %v2025 = vlaneseq
        %v2026 = vshrl.u32 %v2025, 7
        %v2027 = vsub.s32 0, %v2026
        %v2028 = vrot.slane %v2023, %v2027
        %v2030 = vmul.f32 %v1961, %v2028
        %v2031 = vmul.f32 %v1964, %v2028
        %v2032 = vmul.f32 %v1969, %v2028
        %v2033 = vmul.f32 %v1972, %v2028
        %v2034 = vmul.f32 %v1977, %v2028
        %v2035 = vmul.f32 %v1980, %v2028
        %v2036 = vmul.f32 %v1985, %v2028
        %v2037 = vmul.f32 %v1988, %v2028
        %v2038 = vmul.f32 %v1993, %v2028
        %v2039 = vmul.f32 %v1996, %v2028
        %v2040 = vmul.f32 %v2001, %v2028
        %v2041 = vmul.f32 %v2004, %v2028
        %v2042 = vmul.f32 %v2009, %v2028
        %v2043 = vmul.f32 %v2012, %v2028
        %v2044 = vmul.f32 %v2017, %v2028
        %v2045 = vmul.f32 %v2020, %v2028
        %s2046 = scalar_lea.vmem [#allocation8], 1
        %v2047 = vld [vmem:[%s2046] sm:$0x1]
        %v2049 = vlaneseq
        %v2050 = vshrl.u32 %v2049, 7
        %v2051 = vsub.s32 0, %v2050
        %v2052 = vrot.slane %v2047, %v2051
        %v2054 = vadd.f32 %v2030, %v2052
        %v2055 = vadd.f32 %v2031, %v2052
        %v2056 = vadd.f32 %v2032, %v2052
        %v2057 = vadd.f32 %v2033, %v2052
        %v2058 = vadd.f32 %v2034, %v2052
        %v2059 = vadd.f32 %v2035, %v2052
        %v2060 = vadd.f32 %v2036, %v2052
        %v2061 = vadd.f32 %v2037, %v2052
        %v2062 = vadd.f32 %v2038, %v2052
        %v2063 = vadd.f32 %v2039, %v2052
        %v2064 = vadd.f32 %v2040, %v2052
        %v2065 = vadd.f32 %v2041, %v2052
        %v2066 = vadd.f32 %v2042, %v2052
        %v2067 = vadd.f32 %v2043, %v2052
        %v2068 = vadd.f32 %v2044, %v2052
        %v2069 = vadd.f32 %v2045, %v2052
        %v2070 = vmax.f32 %v2054, 0.0
        %v2071 = vmax.f32 %v2055, 0.0
        %v2072 = vmax.f32 %v2056, 0.0
        %v2073 = vmax.f32 %v2057, 0.0
        %v2074 = vmax.f32 %v2058, 0.0
        %v2075 = vmax.f32 %v2059, 0.0
        %v2076 = vmax.f32 %v2060, 0.0
        %v2077 = vmax.f32 %v2061, 0.0
        %v2078 = vmax.f32 %v2062, 0.0
        %v2079 = vmax.f32 %v2063, 0.0
        %v2080 = vmax.f32 %v2064, 0.0
        %v2081 = vmax.f32 %v2065, 0.0
        %v2082 = vmax.f32 %v2066, 0.0
        %v2083 = vmax.f32 %v2067, 0.0
        %v2084 = vmax.f32 %v2068, 0.0
        %v2085 = vmax.f32 %v2069, 0.0
        %2086 = vxpose.xlu0.b32.start [1/16] %v2070, 128
        %2087 = vxpose.xlu0.b32.cont [2/16] %v2071, 128
        %2088 = vxpose.xlu0.b32.cont [3/16] %v2072, 128
        %2089 = vxpose.xlu0.b32.cont [4/16] %v2073, 128
        %2090 = vxpose.xlu0.b32.cont [5/16] %v2074, 128
        %2091 = vxpose.xlu0.b32.cont [6/16] %v2075, 128
        %2092 = vxpose.xlu0.b32.cont [7/16] %v2076, 128
        %2093 = vxpose.xlu0.b32.cont [8/16] %v2077, 128
        %2094 = vxpose.xlu0.b32.cont [9/16] %v2078, 128
        %2095 = vxpose.xlu0.b32.cont [10/16] %v2079, 128
        %2096 = vxpose.xlu0.b32.cont [11/16] %v2080, 128
        %2097 = vxpose.xlu0.b32.cont [12/16] %v2081, 128
        %2098 = vxpose.xlu0.b32.cont [13/16] %v2082, 128
        %2099 = vxpose.xlu0.b32.cont [14/16] %v2083, 128
        %2100 = vxpose.xlu0.b32.cont [15/16] %v2084, 128
        %2101 = vxpose.xlu0.b32.end [16/16] %v2085, 128
        %v2102 = vpop.trf.xlu0
        %v2103 = vpop.trf.xlu0
        %v2104 = vpop.trf.xlu0
        %v2105 = vpop.trf.xlu0
        %v2106 = vpop.trf.xlu0
        %v2107 = vpop.trf.xlu0
        %v2108 = vpop.trf.xlu0
        %v2109 = vpop.trf.xlu0
        %v2110 = vpop.trf.xlu0
        %v2111 = vpop.trf.xlu0
        %v2112 = vpop.trf.xlu0
        %v2113 = vpop.trf.xlu0
        %v2114 = vpop.trf.xlu0
        %v2115 = vpop.trf.xlu0
        %v2116 = vpop.trf.xlu0
        %v2117 = vpop.trf.xlu0
        %2118 = vst [vmem:[%s231] sm:$0xff] %v2102
        %2119 = vst [vmem:[%s231 + $0x8] sm:$0xff] %v2103
        %2120 = vst [vmem:[%s231 + $0x10] sm:$0xff] %v2104
        %2121 = vst [vmem:[%s231 + $0x18] sm:$0xff] %v2105
        %2122 = vst [vmem:[%s231 + $0x20] sm:$0xff] %v2106
        %2123 = vst [vmem:[%s231 + $0x28] sm:$0xff] %v2107
        %2124 = vst [vmem:[%s231 + $0x30] sm:$0xff] %v2108
        %2125 = vst [vmem:[%s231 + $0x38] sm:$0xff] %v2109
        %2126 = vst [vmem:[%s231 + $0x40] sm:$0xff] %v2110
        %2127 = vst [vmem:[%s231 + $0x48] sm:$0xff] %v2111
        %2128 = vst [vmem:[%s231 + $0x50] sm:$0xff] %v2112
        %2129 = vst [vmem:[%s231 + $0x58] sm:$0xff] %v2113
        %2130 = vst [vmem:[%s231 + $0x60] sm:$0xff] %v2114
        %2131 = vst [vmem:[%s231 + $0x68] sm:$0xff] %v2115
        %2132 = vst [vmem:[%s231 + $0x70] sm:$0xff] %v2116
        %2133 = vst [vmem:[%s231 + $0x78] sm:$0xff] %v2117
        %s2134 = sand.u32 %s111, 1
        %s2135 = scalar_lea.sflag [#allocation5], %s2134
        %s2136 = sand.u32 %s111, 1
        %s2137 = smul.addr %s2136, 128
        %s2138 = scalar_lea.vmem [#allocation9], %s2137
        // Predicated region
        $region45: #{aspp_forward.1} parent=31 // pred_check
          %p2139 = pneg %p121
        $region46: #{aspp_forward.1} parent=31 // pred_check_branch
          %2141 = sbr.rel (%p2139) target = $region48
        $region47: #{aspp_forward.1} parent=31 // pred_region
          %s2143 = ssub.s32 2048, 2048
          %2144 = vsyncadd %s2135, %s2143
          %s2145 = smul.addr %s25, 32
          %s2146 = sadd.s32 %s26, %s2145
          %s2147 = smul.addr %s2146, 128
          %s2148 = scalar_lea.hbm %s3, %s2147
          %s2149 = sshll.u32 %s2138, 4
          %s2150 = int_to_ptr.vmem [resolvable:$true] %s2149
          %2155 = dma.vmem_to_hbm [thread:$0]  %s2150, 2048, %s2148, %s2135, 128, 256, 8
        $region48: #{aspp_forward.1} parent=31 // pred_fallthru
          _
      $region32: #{aspp_forward.1} parent=5 // pred_fallthru
        _
      %p2156 = scmp.le.s32.totalorder 2, %s16
      // Predicated region
      $region49: #{aspp_forward.1} parent=5 // pred_check
        %p2157 = pneg %p2156
      $region50: #{aspp_forward.1} parent=5 // pred_check_branch
        %2159 = sbr.rel (%p2157) target = $region52
      $region51: #{aspp_forward.1} parent=5 // pred_region
        %s2160 = ssub.s32 %s16, 2
        // Predicated region
        $region53: #{aspp_forward.1} parent=51 // pred_check
          %p2161 = pneg %p127
        $region54: #{aspp_forward.1} parent=51 // pred_check_branch
          %2163 = sbr.rel (%p2161) target = $region56
        $region55: #{aspp_forward.1} parent=51 // pred_region
          %s2164 = sand.u32 %s112, 1
          %s2165 = scalar_lea.sflag [#allocation5], %s2164
          %s2166 = sand.u32 %s112, 1
          %s2167 = smul.addr %s2166, 128
          %s2168 = scalar_lea.vmem [#allocation9], %s2167
          %2169 = dma.done %s2165, 2048
        $region56: #{aspp_forward.1} parent=51 // pred_fallthru
          _
      $region52: #{aspp_forward.1} parent=5 // pred_fallthru
        _
    $region6: #{aspp_forward.1} parent=1 // loop_footer
      %s20 = sadd.s32 1, %s16
    $region7: #{aspp_forward.1} parent=1 // loop_footer_branch
      %15 = sbr.rel target = $region3
    $region8: #{aspp_forward.1} parent=1 // loop_exit
      _
    %2170 = vsyncpa [#allocation4], 1
    %s2171 = scalar_lea.sflag [#allocation4], 1
    %2172 = vsyncpa %s2171, 1
    %2173 = vsyncpa [#allocation7], 1
    %2174 = vsyncpa [#allocation5], 1
    %s2175 = scalar_lea.sflag [#allocation5], 1
    %2176 = vsyncpa %s2175, 1

</llo_original>
